<compile_context>
chip_gen: v7x
topology: tpu7x:2x2x1
jax: 0.10.0
libtpu: 0.0.40
codegen_flags: <defaults>
</compile_context>

<pallas_src>
import functools

import jax
import jax.numpy as jnp
from jax.experimental import pallas as pl
from jax.experimental.pallas import tpu as pltpu


OUT_WIDTH = 128      # lane-dense fused output slab width
ROWS_PER_STEP = 8    # feature-map rows processed per grid step


def _round_up(x, m):
    return ((x + m - 1) // m) * m


def _rpn_kernel(rows, wpp, cin, obj_lo, obj_hi, x_ref, w_ref, b_ref, out_ref):
    """One row-group of the fused RPN head (conv1 + reg + cls folded).

    x_ref   : (Hp+2, Wpp, Cin) bf16  zero-padded NHWC feature map (VMEM resident)
    w_ref   : (3, 3, Cin, 128) bf16  folded conv1 @ [reg | cls | fg-bg] weights
    b_ref   : (1, 128)         f32   folded bias
    out_ref : (rows*Wpp, 128)  f32   [ reg(4A) | cls(2A) | obj(A) | pad ]
    """
    mp = rows * wpp
    row0 = pl.multiple_of(pl.program_id(0) * rows, rows)

    # Row-shifted flattened views of the padded image.  The reshape is
    # layout-free because wpp is a multiple of 16 (bf16 sublane tile).
    a = [x_ref[pl.ds(row0 + dy, rows)].reshape(mp, cin) for dy in range(3)]

    def col(dx):  # accumulate the 3 vertical taps of one horizontal tap
        s = jnp.dot(a[0], w_ref[0, dx], preferred_element_type=jnp.float32)
        s += jnp.dot(a[1], w_ref[1, dx], preferred_element_type=jnp.float32)
        s += jnp.dot(a[2], w_ref[2, dx], preferred_element_type=jnp.float32)
        return s

    # Horizontal shifts land on the 128-wide f32 partial sums (XLU roll);
    # circular wrap only touches dead padding pixels, which are sliced off
    # in the wrapper.
    y = col(0)
    y = y + pltpu.roll(col(1), shift=mp - 1, axis=0)   # result[q] = col(1)[q+1]
    y = y + pltpu.roll(col(2), shift=mp - 2, axis=0)   # result[q] = col(2)[q+2]
    y = y + b_ref[...]

    # objectness = sigmoid(fg - bg); the difference already lives in columns
    # [obj_lo, obj_hi) thanks to the weight fold.  EUP exp + approx reciprocal
    # over the whole tile, lane-selected into one dense 128-wide store.
    lane = jax.lax.broadcasted_iota(jnp.int32, y.shape, 1)
    sig = pl.reciprocal(1.0 + jnp.exp(-y), approx=True)
    out_ref[...] = jnp.where((lane >= obj_lo) & (lane < obj_hi), sig, y)


def init_params(key, in_channels=64, mid_channels=64, n_anchor=9):
    """Deterministic re-creation of the module's __init__ (N(0, 0.01) weights,
    zero biases), kept in PyTorch OIHW layout."""
    k1, k2, k3 = jax.random.split(key, 3)
    w1 = 0.01 * jax.random.normal(k1, (mid_channels, in_channels, 3, 3), jnp.float32)
    b1 = jnp.zeros((mid_channels,), jnp.float32)
    wreg = 0.01 * jax.random.normal(k2, (n_anchor * 4, mid_channels, 1, 1), jnp.float32)
    breg = jnp.zeros((n_anchor * 4,), jnp.float32)
    wcls = 0.01 * jax.random.normal(k3, (n_anchor * 2, mid_channels, 1, 1), jnp.float32)
    bcls = jnp.zeros((n_anchor * 2,), jnp.float32)
    return (w1, b1, wreg, breg, wcls, bcls)


def prepare_params(params):
    """One-time weight prep (hoisted out of the per-call path).

    forward() applies no nonlinearity after conv1, so conv1 and the two 1x1
    heads fold algebraically into a single 3x3 conv whose output columns are
    [ reg (4A, original order) | cls (2A, original interleaved bg/fg order) |
      fg-bg difference (A, feeds the softmax-as-sigmoid tail) | zero pad ]."""
    w1, b1, wreg, breg, wcls, bcls = params
    cin = w1.shape[1]
    na = wcls.shape[0] // 2
    nreg = wreg.shape[0]
    assert nreg == 4 * na and nreg + 3 * na <= OUT_WIDTH

    w1_hwio = jnp.transpose(w1, (2, 3, 1, 0))                 # (3,3,Cin,Cmid)
    wreg_m = jnp.transpose(wreg[:, :, 0, 0], (1, 0))          # (Cmid, 4A)
    wcls_m = jnp.transpose(wcls[:, :, 0, 0], (1, 0))          # (Cmid, 2A) bg/fg interleaved
    wdiff = wcls_m[:, 1::2] - wcls_m[:, 0::2]                 # (Cmid, A)  fg - bg
    w_head = jnp.concatenate([wreg_m, wcls_m, wdiff], axis=1)         # (Cmid, 7A)
    b_head = jnp.concatenate([breg, bcls, bcls[1::2] - bcls[0::2]])    # (7A,)

    w_eff = jnp.einsum('yxio,oc->yxic', w1_hwio, w_head,
                       precision=jax.lax.Precision.HIGHEST)   # (3,3,Cin,7A)
    b_eff = b1 @ w_head + b_head                              # (7A,)

    nout = w_head.shape[1]
    w_pad = jnp.zeros((3, 3, cin, OUT_WIDTH), jnp.float32).at[..., :nout].set(w_eff)
    b_pad = jnp.zeros((1, OUT_WIDTH), jnp.float32).at[0, :nout].set(b_eff)
    return dict(w=w_pad.astype(jnp.bfloat16), b=b_pad, na=na, nreg=nreg, cin=cin)


def rpn_forward(x_nchw, prep):
    """Pallas implementation of RPN.forward. x_nchw: (1, Cin, H, W) float32."""
    n, cin, H, W = x_nchw.shape
    assert n == 1, "module's .view(1, ...) calls require batch == 1"
    assert cin == prep['cin']
    na, nreg = prep['na'], prep['nreg']
    rows = ROWS_PER_STEP
    wpp = _round_up(W + 2, 16)   # padded width  (x16 keeps bf16 reshapes layout-free)
    hp = _round_up(H, rows)      # padded height (full row-group per grid step)
    mp = rows * wpp

    # NCHW -> NHWC, cast to bf16 *before* padding, embed into the zero canvas:
    # row/col 0 and H+1/W+1 are the conv's SAME padding; anything beyond is dead
    # and sliced off after the kernel.
    x = jnp.transpose(x_nchw, (0, 2, 3, 1))[0].astype(jnp.bfloat16)
    x_pad = jnp.zeros((hp + 2, wpp, cin), jnp.bfloat16)
    x_pad = x_pad.at[1:H + 1, 1:W + 1, :].set(x)

    kernel = functools.partial(_rpn_kernel, rows, wpp, cin,
                               nreg + 2 * na, nreg + 3 * na)
    out = pl.pallas_call(
        kernel,
        out_shape=jax.ShapeDtypeStruct((hp * wpp, OUT_WIDTH), jnp.float32),
        grid=(hp // rows,),
        in_specs=[
            # Native-size padded image: resident across grid steps (constant
            # index), DMA'd once.  ~Cin*HW*2 bytes, vs the 9x im2col slab before.
            pl.BlockSpec((hp + 2, wpp, cin), lambda i: (0, 0, 0)),
            pl.BlockSpec((3, 3, cin, OUT_WIDTH), lambda i: (0, 0, 0, 0)),
            pl.BlockSpec((1, OUT_WIDTH), lambda i: (0, 0)),
        ],
        out_specs=pl.BlockSpec((mp, OUT_WIDTH), lambda i: (i, 0)),
        compiler_params=pltpu.CompilerParams(
            dimension_semantics=("parallel",)),
    )(x_pad, prep['w'], prep['b'])

    # Drop dead rows/cols, then split the fused slab exactly as forward() does.
    out = out.reshape(hp, wpp, OUT_WIDTH)[:H, :W, :].reshape(H * W, OUT_WIDTH)
    reg = out[:, :nreg]
    cls = out[:, nreg:nreg + 2 * na]                 # already interleaved (bg, fg)
    obj = out[:, nreg + 2 * na:nreg + 3 * na]

    pred_anchor_locs = reg.reshape(1, -1, 4)          # (1, H*W*A, 4)
    objectness_score = obj.reshape(1, -1)             # (1, H*W*A)
    pred_cls_scores = cls.reshape(1, -1, 2)           # (1, H*W*A, 2)
    return pred_anchor_locs, objectness_score, pred_cls_scores


def rpn_reference(x_nchw, params):
    """Pure-JAX/XLA reference matching the PyTorch forward, for validation."""
    w1, b1, wreg, breg, wcls, bcls = params
    n, _, H, W = x_nchw.shape
    dn = jax.lax.conv_dimension_numbers(x_nchw.shape, w1.shape, ('NCHW', 'OIHW', 'NCHW'))
    conv = functools.partial(jax.lax.conv_general_dilated,
                             window_strides=(1, 1), dimension_numbers=dn,
                             precision=jax.lax.Precision.HIGHEST)
    x = conv(x_nchw, w1, padding='SAME') + b1[None, :, None, None]
    locs = conv(x, wreg, padding='VALID') + breg[None, :, None, None]
    scores = conv(x, wcls, padding='VALID') + bcls[None, :, None, None]
    locs = jnp.transpose(locs, (0, 2, 3, 1)).reshape(1, -1, 4)
    scores_nhwc = jnp.transpose(scores, (0, 2, 3, 1))
    sm = jax.nn.softmax(scores_nhwc.reshape(1, H, W, -1, 2), axis=4)
    obj = sm[..., 1].reshape(1, -1)
    cls = scores_nhwc.reshape(1, -1, 2)
    return locs, obj, cls


if __name__ == "__main__":
    key = jax.random.PRNGKey(0)
    kx, kparam = jax.random.split(key)

    # small shapes consistent with the module (batch fixed to 1 by the view calls)
    in_channels, mid_channels, n_anchor = 64, 64, 9
    H = W = 16

    x = jax.random.normal(kx, (1, in_channels, H, W), jnp.float32)
    params = init_params(kparam, in_channels, mid_channels, n_anchor)
    prep = prepare_params(params)          # one-time weight fold / layout prep

    fwd = jax.jit(lambda inp: rpn_forward(inp, prep))
    outs = jax.block_until_ready(fwd(x))
    refs = jax.block_until_ready(rpn_reference(x, params))

    names = ("pred_anchor_locs", "objectness_score", "pred_cls_scores")
    for name, o, r in zip(names, outs, refs):
        assert o.shape == r.shape, (name, o.shape, r.shape)
        err = float(jnp.max(jnp.abs(o - r)))
        assert err < 5e-3, (name, err)

    print("KERNEL_OK")
</pallas_src>

<mosaic_0001>
module attributes {stable_mosaic.version = 11 : i64} {
  func.func @_rpn_kernel(%arg0: i32, %arg1: memref<18x32x64xbf16, #tpu.memory_space<vmem>>, %arg2: memref<3x3x64x128xbf16, #tpu.memory_space<vmem>>, %arg3: memref<1x128xf32, #tpu.memory_space<vmem>>, %arg4: memref<256x128xf32, #tpu.memory_space<vmem>>) attributes {dimension_semantics = [#tpu.dimension_semantics<parallel>], iteration_bounds = array<i64: 2>, scalar_prefetch = 0 : i64, scratch_operands = 0 : i64, tpu.core_type = #tpu.core_type<tc>, window_params = [{pipeline_mode = #tpu.pipeline_mode<synchronous>, transform_indices = @transform_0, window_bounds = array<i64: 18, 32, 64>}, {pipeline_mode = #tpu.pipeline_mode<synchronous>, transform_indices = @transform_1, window_bounds = array<i64: 3, 3, 64, 128>}, {pipeline_mode = #tpu.pipeline_mode<synchronous>, transform_indices = @transform_2, window_bounds = array<i64: 1, 128>}, {transform_indices = @transform_3, window_bounds = array<i64: 256, 128>}]} {
    %c8_i32 = arith.constant 8 : i32
    %0 = arith.muli %arg0, %c8_i32 : i32
    %1 = tpu.assume_multiple %0, 8 : i32
    %c0_i32 = arith.constant 0 : i32
    %2 = arith.addi %1, %c0_i32 : i32
    %3 = arith.index_cast %2 : i32 to index
    %c0 = arith.constant 0 : index
    %c0_0 = arith.constant 0 : index
    %4 = vector.load %arg1[%3, %c0, %c0_0] : memref<18x32x64xbf16, #tpu.memory_space<vmem>>, vector<8x32x64xbf16>
    %5 = vector.shape_cast %4 : vector<8x32x64xbf16> to vector<256x64xbf16>
    %c1_i32 = arith.constant 1 : i32
    %6 = arith.addi %1, %c1_i32 : i32
    %7 = arith.index_cast %6 : i32 to index
    %c0_1 = arith.constant 0 : index
    %c0_2 = arith.constant 0 : index
    %8 = vector.load %arg1[%7, %c0_1, %c0_2] : memref<18x32x64xbf16, #tpu.memory_space<vmem>>, vector<8x32x64xbf16>
    %9 = vector.shape_cast %8 : vector<8x32x64xbf16> to vector<256x64xbf16>
    %c2_i32 = arith.constant 2 : i32
    %10 = arith.addi %1, %c2_i32 : i32
    %11 = arith.index_cast %10 : i32 to index
    %c0_3 = arith.constant 0 : index
    %c0_4 = arith.constant 0 : index
    %12 = vector.load %arg1[%11, %c0_3, %c0_4] : memref<18x32x64xbf16, #tpu.memory_space<vmem>>, vector<8x32x64xbf16>
    %13 = vector.shape_cast %12 : vector<8x32x64xbf16> to vector<256x64xbf16>
    %c0_5 = arith.constant 0 : index
    %c0_6 = arith.constant 0 : index
    %c0_7 = arith.constant 0 : index
    %c0_8 = arith.constant 0 : index
    %14 = vector.load %arg2[%c0_5, %c0_6, %c0_7, %c0_8] : memref<3x3x64x128xbf16, #tpu.memory_space<vmem>>, vector<1x1x64x128xbf16>
    %15 = vector.shape_cast %14 : vector<1x1x64x128xbf16> to vector<64x128xbf16>
    %cst = arith.constant dense<0.000000e+00> : vector<256x128xf32>
    %16 = tpu.matmul %5, %15, %cst {dimension_numbers = #tpu.dot_dimension_numbers<[1], [0], [0], [1], [0, 0, 1, 1], [], []>} : vector<256x64xbf16>, vector<64x128xbf16>, vector<256x128xf32> -> vector<256x128xf32>
    %c1 = arith.constant 1 : index
    %c0_9 = arith.constant 0 : index
    %c0_10 = arith.constant 0 : index
    %c0_11 = arith.constant 0 : index
    %17 = vector.load %arg2[%c1, %c0_9, %c0_10, %c0_11] : memref<3x3x64x128xbf16, #tpu.memory_space<vmem>>, vector<1x1x64x128xbf16>
    %18 = vector.shape_cast %17 : vector<1x1x64x128xbf16> to vector<64x128xbf16>
    %cst_12 = arith.constant dense<0.000000e+00> : vector<256x128xf32>
    %19 = tpu.matmul %9, %18, %cst_12 {dimension_numbers = #tpu.dot_dimension_numbers<[1], [0], [0], [1], [0, 0, 1, 1], [], []>} : vector<256x64xbf16>, vector<64x128xbf16>, vector<256x128xf32> -> vector<256x128xf32>
    %20 = arith.addf %16, %19 : vector<256x128xf32>
    %c2 = arith.constant 2 : index
    %c0_13 = arith.constant 0 : index
    %c0_14 = arith.constant 0 : index
    %c0_15 = arith.constant 0 : index
    %21 = vector.load %arg2[%c2, %c0_13, %c0_14, %c0_15] : memref<3x3x64x128xbf16, #tpu.memory_space<vmem>>, vector<1x1x64x128xbf16>
    %22 = vector.shape_cast %21 : vector<1x1x64x128xbf16> to vector<64x128xbf16>
    %cst_16 = arith.constant dense<0.000000e+00> : vector<256x128xf32>
    %23 = tpu.matmul %13, %22, %cst_16 {dimension_numbers = #tpu.dot_dimension_numbers<[1], [0], [0], [1], [0, 0, 1, 1], [], []>} : vector<256x64xbf16>, vector<64x128xbf16>, vector<256x128xf32> -> vector<256x128xf32>
    %24 = arith.addf %20, %23 : vector<256x128xf32>
    %c0_17 = arith.constant 0 : index
    %c1_18 = arith.constant 1 : index
    %c0_19 = arith.constant 0 : index
    %c0_20 = arith.constant 0 : index
    %25 = vector.load %arg2[%c0_17, %c1_18, %c0_19, %c0_20] : memref<3x3x64x128xbf16, #tpu.memory_space<vmem>>, vector<1x1x64x128xbf16>
    %26 = vector.shape_cast %25 : vector<1x1x64x128xbf16> to vector<64x128xbf16>
    %cst_21 = arith.constant dense<0.000000e+00> : vector<256x128xf32>
    %27 = tpu.matmul %5, %26, %cst_21 {dimension_numbers = #tpu.dot_dimension_numbers<[1], [0], [0], [1], [0, 0, 1, 1], [], []>} : vector<256x64xbf16>, vector<64x128xbf16>, vector<256x128xf32> -> vector<256x128xf32>
    %c1_22 = arith.constant 1 : index
    %c1_23 = arith.constant 1 : index
    %c0_24 = arith.constant 0 : index
    %c0_25 = arith.constant 0 : index
    %28 = vector.load %arg2[%c1_22, %c1_23, %c0_24, %c0_25] : memref<3x3x64x128xbf16, #tpu.memory_space<vmem>>, vector<1x1x64x128xbf16>
    %29 = vector.shape_cast %28 : vector<1x1x64x128xbf16> to vector<64x128xbf16>
    %cst_26 = arith.constant dense<0.000000e+00> : vector<256x128xf32>
    %30 = tpu.matmul %9, %29, %cst_26 {dimension_numbers = #tpu.dot_dimension_numbers<[1], [0], [0], [1], [0, 0, 1, 1], [], []>} : vector<256x64xbf16>, vector<64x128xbf16>, vector<256x128xf32> -> vector<256x128xf32>
    %31 = arith.addf %27, %30 : vector<256x128xf32>
    %c2_27 = arith.constant 2 : index
    %c1_28 = arith.constant 1 : index
    %c0_29 = arith.constant 0 : index
    %c0_30 = arith.constant 0 : index
    %32 = vector.load %arg2[%c2_27, %c1_28, %c0_29, %c0_30] : memref<3x3x64x128xbf16, #tpu.memory_space<vmem>>, vector<1x1x64x128xbf16>
    %33 = vector.shape_cast %32 : vector<1x1x64x128xbf16> to vector<64x128xbf16>
    %cst_31 = arith.constant dense<0.000000e+00> : vector<256x128xf32>
    %34 = tpu.matmul %13, %33, %cst_31 {dimension_numbers = #tpu.dot_dimension_numbers<[1], [0], [0], [1], [0, 0, 1, 1], [], []>} : vector<256x64xbf16>, vector<64x128xbf16>, vector<256x128xf32> -> vector<256x128xf32>
    %35 = arith.addf %31, %34 : vector<256x128xf32>
    %c255_i32 = arith.constant 255 : i32
    %36 = tpu.dynamic_rotate %35 by %c255_i32 dim 0 : vector<256x128xf32>, i32 -> vector<256x128xf32>
    %37 = arith.addf %24, %36 : vector<256x128xf32>
    %c0_32 = arith.constant 0 : index
    %c2_33 = arith.constant 2 : index
    %c0_34 = arith.constant 0 : index
    %c0_35 = arith.constant 0 : index
    %38 = vector.load %arg2[%c0_32, %c2_33, %c0_34, %c0_35] : memref<3x3x64x128xbf16, #tpu.memory_space<vmem>>, vector<1x1x64x128xbf16>
    %39 = vector.shape_cast %38 : vector<1x1x64x128xbf16> to vector<64x128xbf16>
    %cst_36 = arith.constant dense<0.000000e+00> : vector<256x128xf32>
    %40 = tpu.matmul %5, %39, %cst_36 {dimension_numbers = #tpu.dot_dimension_numbers<[1], [0], [0], [1], [0, 0, 1, 1], [], []>} : vector<256x64xbf16>, vector<64x128xbf16>, vector<256x128xf32> -> vector<256x128xf32>
    %c1_37 = arith.constant 1 : index
    %c2_38 = arith.constant 2 : index
    %c0_39 = arith.constant 0 : index
    %c0_40 = arith.constant 0 : index
    %41 = vector.load %arg2[%c1_37, %c2_38, %c0_39, %c0_40] : memref<3x3x64x128xbf16, #tpu.memory_space<vmem>>, vector<1x1x64x128xbf16>
    %42 = vector.shape_cast %41 : vector<1x1x64x128xbf16> to vector<64x128xbf16>
    %cst_41 = arith.constant dense<0.000000e+00> : vector<256x128xf32>
    %43 = tpu.matmul %9, %42, %cst_41 {dimension_numbers = #tpu.dot_dimension_numbers<[1], [0], [0], [1], [0, 0, 1, 1], [], []>} : vector<256x64xbf16>, vector<64x128xbf16>, vector<256x128xf32> -> vector<256x128xf32>
    %44 = arith.addf %40, %43 : vector<256x128xf32>
    %c2_42 = arith.constant 2 : index
    %c2_43 = arith.constant 2 : index
    %c0_44 = arith.constant 0 : index
    %c0_45 = arith.constant 0 : index
    %45 = vector.load %arg2[%c2_42, %c2_43, %c0_44, %c0_45] : memref<3x3x64x128xbf16, #tpu.memory_space<vmem>>, vector<1x1x64x128xbf16>
    %46 = vector.shape_cast %45 : vector<1x1x64x128xbf16> to vector<64x128xbf16>
    %cst_46 = arith.constant dense<0.000000e+00> : vector<256x128xf32>
    %47 = tpu.matmul %13, %46, %cst_46 {dimension_numbers = #tpu.dot_dimension_numbers<[1], [0], [0], [1], [0, 0, 1, 1], [], []>} : vector<256x64xbf16>, vector<64x128xbf16>, vector<256x128xf32> -> vector<256x128xf32>
    %48 = arith.addf %44, %47 : vector<256x128xf32>
    %c254_i32 = arith.constant 254 : i32
    %49 = tpu.dynamic_rotate %48 by %c254_i32 dim 0 : vector<256x128xf32>, i32 -> vector<256x128xf32>
    %50 = arith.addf %37, %49 : vector<256x128xf32>
    %c0_47 = arith.constant 0 : index
    %c0_48 = arith.constant 0 : index
    %51 = vector.load %arg3[%c0_47, %c0_48] : memref<1x128xf32, #tpu.memory_space<vmem>>, vector<1x128xf32>
    %52 = vector.broadcast %51 : vector<1x128xf32> to vector<256x128xf32>
    %53 = arith.addf %50, %52 : vector<256x128xf32>
    %54 = tpu.iota {dimensions = array<i32: 1>} : vector<256x128xi32>
    %cst_49 = arith.constant 0.000000e+00 : f32
    %55 = vector.broadcast %cst_49 : f32 to vector<256x128xf32>
    %56 = arith.subf %55, %53 : vector<256x128xf32>
    %57 = math.exp %56 : vector<256x128xf32>
    %cst_50 = arith.constant 1.000000e+00 : f32
    %58 = vector.broadcast %cst_50 : f32 to vector<256x128xf32>
    %59 = arith.addf %58, %57 : vector<256x128xf32>
    %60 = tpu.reciprocal %59 {approx = true} : vector<256x128xf32> -> vector<256x128xf32>
    %c54_i32 = arith.constant 54 : i32
    %61 = vector.broadcast %c54_i32 : i32 to vector<256x128xi32>
    %62 = arith.cmpi sge, %54, %61 : vector<256x128xi32>
    %c63_i32 = arith.constant 63 : i32
    %63 = vector.broadcast %c63_i32 : i32 to vector<256x128xi32>
    %64 = arith.cmpi slt, %54, %63 : vector<256x128xi32>
    %65 = arith.andi %62, %64 : vector<256x128xi1>
    %66 = arith.select %65, %60, %53 : vector<256x128xi1>, vector<256x128xf32>
    %c0_51 = arith.constant 0 : index
    %c0_52 = arith.constant 0 : index
    %67 = vector.load %arg4[%c0_51, %c0_52] : memref<256x128xf32, #tpu.memory_space<vmem>>, vector<256x128xf32>
    tpu.vector_store %arg4[%c0_51, %c0_52], %66 {strides = array<i32>} : memref<256x128xf32, #tpu.memory_space<vmem>>, vector<256x128xf32>,
    return
  }
  func.func @transform_0(%arg0: i32) -> (i32, i32, i32) {
    %c0_i32 = arith.constant 0 : i32
    %c0_i32_0 = arith.constant 0 : i32
    %c0_i32_1 = arith.constant 0 : i32
    %c0_i32_2 = arith.constant 0 : i32
    return %c0_i32, %c0_i32_0, %c0_i32_1 : i32, i32, i32
  }
  func.func @transform_1(%arg0: i32) -> (i32, i32, i32, i32) {
    %c0_i32 = arith.constant 0 : i32
    %c0_i32_0 = arith.constant 0 : i32
    %c0_i32_1 = arith.constant 0 : i32
    %c0_i32_2 = arith.constant 0 : i32
    %c0_i32_3 = arith.constant 0 : i32
    return %c0_i32, %c0_i32_0, %c0_i32_1, %c0_i32_2 : i32, i32, i32, i32
  }
  func.func @transform_2(%arg0: i32) -> (i32, i32) {
    %c0_i32 = arith.constant 0 : i32
    %c0_i32_0 = arith.constant 0 : i32
    %c0_i32_1 = arith.constant 0 : i32
    return %c0_i32, %c0_i32_0 : i32, i32
  }
  func.func @transform_3(%arg0: i32) -> (i32, i32) {
    %c0_i32 = arith.constant 0 : i32
    %c0_i32_0 = arith.constant 0 : i32
    return %arg0, %c0_i32 : i32, i32
  }
}

</mosaic_0001>

<llo_original>
// kernel: _lambda_.1
$region0: #{_lambda_.1}
  #allocation0 [shape = 'u32[]', space=smem, size = 0x4, offset = 0x4, fixed_abs, tag = 'smem constant byte address 0x4 - core index']
  #allocation1 [shape = 'u32[144,128]{1,0:T(1,128)}', space=vmem, size = 0x12000, scoped, tag = 'internal scratch']
  %s0 = inlined_call_operand.vmem [shape: bf16[18,32,64], index: 0, kind: input, shape index: {}]
  %s1 = inlined_call_operand.hbm [shape: bf16[3,3,64,128], index: 1, kind: input, shape index: {}]
  %s2 = inlined_call_operand.vmem [shape: f32[1,128], index: 2, kind: input, shape index: {}]
  %s3 = inlined_call_operand.vmem [shape: f32[512,128], index: 3, kind: output, shape index: {}]
  %s4 = sld [smem:[#allocation0]]
  $region49: #{_lambda_.1} parent=0
    _
  %s6 = ssub.s32 1, %s4
  %s7 = scalar_select 0, %s6, %s4
  $region1: #{_lambda_.1} parent=0
    #allocation2 [shape = 'u8[147456]{0}', space=vmem, size = 0x24000, scoped, tag = 'input window, operand 1, single buffered']
    #allocation3 [shape = 's32[2]{0}', space=sflag, size = 0x8, scoped, tag = 'scoped memory for _lambda_.1']
    %8 = vsyncpa [#allocation3], 0
    loop: start=0, step=1, limit=4
    $region2: #{_lambda_.1} parent=1 // loop_pre_header
      _
    $region3: #{_lambda_.1} parent=1 // loop_header
      %s10 = sphi 0, %s14
      %p11 = scmp.ge.s32.totalorder %s10, 4
      %s18 = sphi 0, %s18
      %s20 = sphi 0, %s18
      %s21 = sphi 0, %s20
      %s35 = sphi 0, %s21
      %s39 = sphi 0, %s39
      %s41 = sphi 0, %s39
      %s42 = sphi 0, %s41
      %s56 = sphi 0, %s42
      %s60 = sphi 0, %s60
      %s62 = sphi 0, %s60
      %s63 = sphi 0, %s62
      %s77 = sphi 0, %s63
      %s83 = sphi 0, %s85
      %s86 = sphi 0, %s83
      %s87 = sphi 0, %s86
      %s103 = sphi 0, %s87
    $region4: #{_lambda_.1} parent=1 // loop_header_branch
      %13 = sbr.rel (%p11) target = $region8
    $region5: #{_lambda_.1} parent=1 // loop_body
      %s15 = ssub.s32 %s10, 1
      %s16 = ssub.s32 %s10, 2
      %s17 = sadd.s32 %s10, 1
      %s19 = sadd.s32 %s18, 1
      %p22 = scmp.eq.s32.totalorder %s10, 1
      %p23 = scmp.ne.s32.totalorder %s18, %s20
      %p24 = scmp.eq.s32.totalorder %s10, 0
      %p25 = por %p23, %p24
      %p26 = scmp.ne.s32.totalorder %s18, %s20
      %p27 = scmp.eq.s32.totalorder %s15, 1
      %p28 = por %p26, %p27
      %p29 = scmp.ne.s32.totalorder %s20, %s21
      %p30 = scmp.eq.s32.totalorder %s15, 0
      %p31 = por %p29, %p30
      %p32 = scmp.ne.s32.totalorder %s20, %s21
      %p33 = scmp.eq.s32.totalorder %s16, 1
      %p34 = por %p32, %p33
      %p36 = scmp.ne.s32.totalorder %s21, %s35
      %p37 = scmp.eq.s32.totalorder %s16, 0
      %p38 = por %p36, %p37
      %s40 = sadd.s32 %s39, 1
      %p43 = scmp.eq.s32.totalorder %s10, 1
      %p44 = scmp.ne.s32.totalorder %s39, %s41
      %p45 = scmp.eq.s32.totalorder %s10, 0
      %p46 = por %p44, %p45
      %p47 = scmp.ne.s32.totalorder %s39, %s41
      %p48 = scmp.eq.s32.totalorder %s15, 1
      %p49 = por %p47, %p48
      %p50 = scmp.ne.s32.totalorder %s41, %s42
      %p51 = scmp.eq.s32.totalorder %s15, 0
      %p52 = por %p50, %p51
      %p53 = scmp.ne.s32.totalorder %s41, %s42
      %p54 = scmp.eq.s32.totalorder %s16, 1
      %p55 = por %p53, %p54
      %p57 = scmp.ne.s32.totalorder %s42, %s56
      %p58 = scmp.eq.s32.totalorder %s16, 0
      %p59 = por %p57, %p58
      %s61 = sadd.s32 %s60, 1
      %p64 = scmp.eq.s32.totalorder %s10, 1
      %p65 = scmp.ne.s32.totalorder %s60, %s62
      %p66 = scmp.eq.s32.totalorder %s10, 0
      %p67 = por %p65, %p66
      %p68 = scmp.ne.s32.totalorder %s60, %s62
      %p69 = scmp.eq.s32.totalorder %s15, 1
      %p70 = por %p68, %p69
      %p71 = scmp.ne.s32.totalorder %s62, %s63
      %p72 = scmp.eq.s32.totalorder %s15, 0
      %p73 = por %p71, %p72
      %p74 = scmp.ne.s32.totalorder %s62, %s63
      %p75 = scmp.eq.s32.totalorder %s16, 1
      %p76 = por %p74, %p75
      %p78 = scmp.ne.s32.totalorder %s63, %s77
      %p79 = scmp.eq.s32.totalorder %s16, 0
      %p80 = por %p78, %p79
      %s81 = ssub.s32 %s10, %s17
      %p82 = scmp.eq.s32.totalorder %s81, 0
      %s84 = sadd.s32 %s83, 1
      %s85 = scalar_select %p82, %s83, %s84
      %p88 = pneg %p82
      %p89 = scmp.eq.s32.totalorder %s10, 1
      %p90 = por %p88, %p89
      %p91 = scmp.ne.s32.totalorder %s83, %s86
      %p92 = scmp.eq.s32.totalorder %s10, 0
      %p93 = por %p91, %p92
      %p94 = scmp.ne.s32.totalorder %s83, %s86
      %p95 = scmp.eq.s32.totalorder %s15, 1
      %p96 = por %p94, %p95
      %p97 = scmp.ne.s32.totalorder %s86, %s87
      %p98 = scmp.eq.s32.totalorder %s15, 0
      %p99 = por %p97, %p98
      %p100 = scmp.ne.s32.totalorder %s86, %s87
      %p101 = scmp.eq.s32.totalorder %s16, 1
      %p102 = por %p100, %p101
      %p104 = scmp.ne.s32.totalorder %s87, %s103
      %p105 = scmp.eq.s32.totalorder %s16, 0
      %p106 = por %p104, %p105
      %p107 = scmp.le.s32.totalorder 1, %s10
      %p108 = scmp.lt.s32.totalorder %s10, 3
      %p109 = pnand %p107, %p108
      %p110 = pneg %p109
      // Predicated region
      $region9: #{_lambda_.1} parent=5 // pred_check
        _
      $region10: #{_lambda_.1} parent=5 // pred_check_branch
        %112 = sbr.rel (%p109) target = $region12
      $region11: #{_lambda_.1} parent=5 // pred_region
        %s113 = ssub.s32 %s10, 1
        // Predicated region
        $region13: #{_lambda_.1} parent=11 // pred_check
          %p114 = pneg %p31
        $region14: #{_lambda_.1} parent=11 // pred_check_branch
          %116 = sbr.rel (%p114) target = $region16
        $region15: #{_lambda_.1} parent=11 // pred_region
          _
        $region16: #{_lambda_.1} parent=11 // pred_fallthru
          _
        // Predicated region
        $region17: #{_lambda_.1} parent=11 // pred_check
          %p117 = pneg %p52
        $region18: #{_lambda_.1} parent=11 // pred_check_branch
          %119 = sbr.rel (%p117) target = $region20
        $region19: #{_lambda_.1} parent=11 // pred_region
          %s121 = ssub.s32 4608, 4608
          %122 = vsyncadd [#allocation3], %s121
          %s123 = sshll.u32 [#allocation2], 4
          %s124 = int_to_ptr.vmem [resolvable:$true] %s123
          %129 = dma.hbm_to_vmem [thread:$0]  %s1, 4608, %s124, [#allocation3], 64, 64, 4
        $region20: #{_lambda_.1} parent=11 // pred_fallthru
          _
        // Predicated region
        $region21: #{_lambda_.1} parent=11 // pred_check
          %p130 = pneg %p73
        $region22: #{_lambda_.1} parent=11 // pred_check_branch
          %132 = sbr.rel (%p130) target = $region24
        $region23: #{_lambda_.1} parent=11 // pred_region
          _
        $region24: #{_lambda_.1} parent=11 // pred_fallthru
          _
      $region12: #{_lambda_.1} parent=5 // pred_fallthru
        _
      %p133 = scmp.lt.s32.totalorder %s10, 2
      // Predicated region
      $region25: #{_lambda_.1} parent=5 // pred_check
        %p134 = pneg %p133
      $region26: #{_lambda_.1} parent=5 // pred_check_branch
        %136 = sbr.rel (%p134) target = $region28
      $region27: #{_lambda_.1} parent=5 // pred_region
        _
      $region28: #{_lambda_.1} parent=5 // pred_fallthru
        _
      %p137 = scmp.le.s32.totalorder 1, %s10
      %p138 = scmp.lt.s32.totalorder %s10, 3
      %p139 = pnand %p137, %p138
      %p140 = pneg %p139
      // Predicated region
      $region29: #{_lambda_.1} parent=5 // pred_check
        _
      $region30: #{_lambda_.1} parent=5 // pred_check_branch
        %142 = sbr.rel (%p139) target = $region32
      $region31: #{_lambda_.1} parent=5 // pred_region
        %s143 = ssub.s32 %s10, 1
        // Predicated region
        $region33: #{_lambda_.1} parent=31 // pred_check
          %p144 = pneg %p52
        $region34: #{_lambda_.1} parent=31 // pred_check_branch
          %146 = sbr.rel (%p144) target = $region36
        $region35: #{_lambda_.1} parent=31 // pred_region
          %147 = dma.done [#allocation3], 4608
        $region36: #{_lambda_.1} parent=31 // pred_fallthru
          _
        %p148 = pneg %p31
        %p149 = pneg %p28
        %p150 = pneg %p52
        %p151 = pneg %p49
        %p152 = pneg %p73
        %p153 = pneg %p70
        %p154 = pneg %p99
        %p155 = pneg %p96
        %s156 = smul.u32 32, %s15
        %p157 = scmp.lt.s32.totalorder %s156, 63
        %s158 = scalar_select %p157, %s156, 63
        %s159 = smul.addr %s158, 8
        %s160 = scalar_lea.vmem %s3, %s159
        %s161 = smul.u32 32, %s15
        %p162 = scmp.lt.s32.totalorder %s161, 63
        %s163 = scalar_select %p162, %s161, 63
        %s164 = smul.addr %s163, 8
        %s165 = scalar_lea.vmem %s3, %s164
        %s166 = smul.u32 32, %s15
        %s168 = smul.u32 %s15, 8
        %s169 = smul.u32 %s168, 4
        %s170 = smul.addr %s169, 4
        %s171 = scalar_lea.vmem %s0, %s170
        %v172 = vld [vmem:[%s171] sm:$0xf]
        %v173 = vld [vmem:[%s171 + $0x4] sm:$0xf]
        %v174 = vld [vmem:[%s171 + $0x8] sm:$0xf]
        %v175 = vld [vmem:[%s171 + $0xc] sm:$0xf]
        %v176 = vld [vmem:[%s171 + $0x10] sm:$0xf]
        %v177 = vld [vmem:[%s171 + $0x14] sm:$0xf]
        %v178 = vld [vmem:[%s171 + $0x18] sm:$0xf]
        %v179 = vld [vmem:[%s171 + $0x1c] sm:$0xf]
        %v180 = vld [vmem:[%s171 + $0x20] sm:$0xf]
        %v181 = vld [vmem:[%s171 + $0x24] sm:$0xf]
        %v182 = vld [vmem:[%s171 + $0x28] sm:$0xf]
        %v183 = vld [vmem:[%s171 + $0x2c] sm:$0xf]
        %v184 = vld [vmem:[%s171 + $0x30] sm:$0xf]
        %v185 = vld [vmem:[%s171 + $0x34] sm:$0xf]
        %v186 = vld [vmem:[%s171 + $0x38] sm:$0xf]
        %v187 = vld [vmem:[%s171 + $0x3c] sm:$0xf]
        %v188 = vld [vmem:[%s171 + $0x40] sm:$0xf]
        %v189 = vld [vmem:[%s171 + $0x44] sm:$0xf]
        %v190 = vld [vmem:[%s171 + $0x48] sm:$0xf]
        %v191 = vld [vmem:[%s171 + $0x4c] sm:$0xf]
        %v192 = vld [vmem:[%s171 + $0x50] sm:$0xf]
        %v193 = vld [vmem:[%s171 + $0x54] sm:$0xf]
        %v194 = vld [vmem:[%s171 + $0x58] sm:$0xf]
        %v195 = vld [vmem:[%s171 + $0x5c] sm:$0xf]
        %v196 = vld [vmem:[%s171 + $0x60] sm:$0xf]
        %v197 = vld [vmem:[%s171 + $0x64] sm:$0xf]
        %v198 = vld [vmem:[%s171 + $0x68] sm:$0xf]
        %v199 = vld [vmem:[%s171 + $0x6c] sm:$0xf]
        %v200 = vld [vmem:[%s171 + $0x70] sm:$0xf]
        %v201 = vld [vmem:[%s171 + $0x74] sm:$0xf]
        %v202 = vld [vmem:[%s171 + $0x78] sm:$0xf]
        %v203 = vld [vmem:[%s171 + $0x7c] sm:$0xf]
        %s204 = sadd.s32 %s168, 1
        %s205 = smul.u32 %s204, 4
        %s206 = smul.addr %s205, 4
        %s207 = scalar_lea.vmem %s0, %s206
        %v208 = vld [vmem:[%s207] sm:$0xf]
        %v209 = vld [vmem:[%s207 + $0x4] sm:$0xf]
        %v210 = vld [vmem:[%s207 + $0x8] sm:$0xf]
        %v211 = vld [vmem:[%s207 + $0xc] sm:$0xf]
        %v212 = vld [vmem:[%s207 + $0x10] sm:$0xf]
        %v213 = vld [vmem:[%s207 + $0x14] sm:$0xf]
        %v214 = vld [vmem:[%s207 + $0x18] sm:$0xf]
        %v215 = vld [vmem:[%s207 + $0x1c] sm:$0xf]
        %v216 = vld [vmem:[%s207 + $0x20] sm:$0xf]
        %v217 = vld [vmem:[%s207 + $0x24] sm:$0xf]
        %v218 = vld [vmem:[%s207 + $0x28] sm:$0xf]
        %v219 = vld [vmem:[%s207 + $0x2c] sm:$0xf]
        %v220 = vld [vmem:[%s207 + $0x30] sm:$0xf]
        %v221 = vld [vmem:[%s207 + $0x34] sm:$0xf]
        %v222 = vld [vmem:[%s207 + $0x38] sm:$0xf]
        %v223 = vld [vmem:[%s207 + $0x3c] sm:$0xf]
        %v224 = vld [vmem:[%s207 + $0x40] sm:$0xf]
        %v225 = vld [vmem:[%s207 + $0x44] sm:$0xf]
        %v226 = vld [vmem:[%s207 + $0x48] sm:$0xf]
        %v227 = vld [vmem:[%s207 + $0x4c] sm:$0xf]
        %v228 = vld [vmem:[%s207 + $0x50] sm:$0xf]
        %v229 = vld [vmem:[%s207 + $0x54] sm:$0xf]
        %v230 = vld [vmem:[%s207 + $0x58] sm:$0xf]
        %v231 = vld [vmem:[%s207 + $0x5c] sm:$0xf]
        %v232 = vld [vmem:[%s207 + $0x60] sm:$0xf]
        %v233 = vld [vmem:[%s207 + $0x64] sm:$0xf]
        %v234 = vld [vmem:[%s207 + $0x68] sm:$0xf]
        %v235 = vld [vmem:[%s207 + $0x6c] sm:$0xf]
        %v236 = vld [vmem:[%s207 + $0x70] sm:$0xf]
        %v237 = vld [vmem:[%s207 + $0x74] sm:$0xf]
        %v238 = vld [vmem:[%s207 + $0x78] sm:$0xf]
        %v239 = vld [vmem:[%s207 + $0x7c] sm:$0xf]
        %s240 = sadd.s32 %s168, 2
        %s241 = smul.u32 %s240, 4
        %s242 = smul.addr %s241, 4
        %s243 = scalar_lea.vmem %s0, %s242
        %v244 = vld [vmem:[%s243] sm:$0xf]
        %v245 = vld [vmem:[%s243 + $0x4] sm:$0xf]
        %v246 = vld [vmem:[%s243 + $0x8] sm:$0xf]
        %v247 = vld [vmem:[%s243 + $0xc] sm:$0xf]
        %v248 = vld [vmem:[%s243 + $0x10] sm:$0xf]
        %v249 = vld [vmem:[%s243 + $0x14] sm:$0xf]
        %v250 = vld [vmem:[%s243 + $0x18] sm:$0xf]
        %v251 = vld [vmem:[%s243 + $0x1c] sm:$0xf]
        %v252 = vld [vmem:[%s243 + $0x20] sm:$0xf]
        %v253 = vld [vmem:[%s243 + $0x24] sm:$0xf]
        %v254 = vld [vmem:[%s243 + $0x28] sm:$0xf]
        %v255 = vld [vmem:[%s243 + $0x2c] sm:$0xf]
        %v256 = vld [vmem:[%s243 + $0x30] sm:$0xf]
        %v257 = vld [vmem:[%s243 + $0x34] sm:$0xf]
        %v258 = vld [vmem:[%s243 + $0x38] sm:$0xf]
        %v259 = vld [vmem:[%s243 + $0x3c] sm:$0xf]
        %v260 = vld [vmem:[%s243 + $0x40] sm:$0xf]
        %v261 = vld [vmem:[%s243 + $0x44] sm:$0xf]
        %v262 = vld [vmem:[%s243 + $0x48] sm:$0xf]
        %v263 = vld [vmem:[%s243 + $0x4c] sm:$0xf]
        %v264 = vld [vmem:[%s243 + $0x50] sm:$0xf]
        %v265 = vld [vmem:[%s243 + $0x54] sm:$0xf]
        %v266 = vld [vmem:[%s243 + $0x58] sm:$0xf]
        %v267 = vld [vmem:[%s243 + $0x5c] sm:$0xf]
        %v268 = vld [vmem:[%s243 + $0x60] sm:$0xf]
        %v269 = vld [vmem:[%s243 + $0x64] sm:$0xf]
        %v270 = vld [vmem:[%s243 + $0x68] sm:$0xf]
        %v271 = vld [vmem:[%s243 + $0x6c] sm:$0xf]
        %v272 = vld [vmem:[%s243 + $0x70] sm:$0xf]
        %v273 = vld [vmem:[%s243 + $0x74] sm:$0xf]
        %v274 = vld [vmem:[%s243 + $0x78] sm:$0xf]
        %v275 = vld [vmem:[%s243 + $0x7c] sm:$0xf]
        %v276 = vld [vmem:[#allocation2] sm:$0xf]
        %v277 = vld [vmem:[#allocation2 + $0x4] sm:$0xf]
        %v278 = vld [vmem:[#allocation2 + $0x8] sm:$0xf]
        %v279 = vld [vmem:[#allocation2 + $0xc] sm:$0xf]
        %v280 = vld [vmem:[#allocation2 + $0x10] sm:$0xf]
        %v281 = vld [vmem:[#allocation2 + $0x14] sm:$0xf]
        %v282 = vld [vmem:[#allocation2 + $0x18] sm:$0xf]
        %v283 = vld [vmem:[#allocation2 + $0x1c] sm:$0xf]
        %s284 = scalar_lea.vmem [#allocation2], 96
        %v285 = vld [vmem:[%s284] sm:$0xf]
        %v286 = vld [vmem:[%s284 + $0x4] sm:$0xf]
        %v287 = vld [vmem:[%s284 + $0x8] sm:$0xf]
        %v288 = vld [vmem:[%s284 + $0xc] sm:$0xf]
        %v289 = vld [vmem:[%s284 + $0x10] sm:$0xf]
        %v290 = vld [vmem:[%s284 + $0x14] sm:$0xf]
        %v291 = vld [vmem:[%s284 + $0x18] sm:$0xf]
        %v292 = vld [vmem:[%s284 + $0x1c] sm:$0xf]
        %v325 = vunpack.c.l.b16 %v208
        %v326 = vunpack.c.l.b16 %v209
        %v327 = vunpack.c.l.b16 %v210
        %v328 = vunpack.c.l.b16 %v211
        %v329 = vunpack.c.l.b16 %v212
        %v330 = vunpack.c.l.b16 %v213
        %v331 = vunpack.c.l.b16 %v214
        %v332 = vunpack.c.l.b16 %v215
        %v333 = vunpack.c.l.b16 %v216
        %v334 = vunpack.c.l.b16 %v217
        %v335 = vunpack.c.l.b16 %v218
        %v336 = vunpack.c.l.b16 %v219
        %v337 = vunpack.c.l.b16 %v220
        %v338 = vunpack.c.l.b16 %v221
        %v339 = vunpack.c.l.b16 %v222
        %v340 = vunpack.c.l.b16 %v223
        %v341 = vunpack.c.l.b16 %v224
        %v342 = vunpack.c.l.b16 %v225
        %v343 = vunpack.c.l.b16 %v226
        %v344 = vunpack.c.l.b16 %v227
        %v345 = vunpack.c.l.b16 %v228
        %v346 = vunpack.c.l.b16 %v229
        %v347 = vunpack.c.l.b16 %v230
        %v348 = vunpack.c.l.b16 %v231
        %v349 = vunpack.c.l.b16 %v232
        %v350 = vunpack.c.l.b16 %v233
        %v351 = vunpack.c.l.b16 %v234
        %v352 = vunpack.c.l.b16 %v235
        %v353 = vunpack.c.l.b16 %v236
        %v354 = vunpack.c.l.b16 %v237
        %v355 = vunpack.c.l.b16 %v238
        %v356 = vunpack.c.l.b16 %v239
        %v357 = vpack.c.b16 %v326, %v325
        %v358 = vpack.c.b16 %v328, %v327
        %v359 = vpack.c.b16 %v330, %v329
        %v360 = vpack.c.b16 %v332, %v331
        %v361 = vpack.c.b16 %v334, %v333
        %v362 = vpack.c.b16 %v336, %v335
        %v363 = vpack.c.b16 %v338, %v337
        %v364 = vpack.c.b16 %v340, %v339
        %v365 = vpack.c.b16 %v342, %v341
        %v366 = vpack.c.b16 %v344, %v343
        %v367 = vpack.c.b16 %v346, %v345
        %v368 = vpack.c.b16 %v348, %v347
        %v369 = vpack.c.b16 %v350, %v349
        %v370 = vpack.c.b16 %v352, %v351
        %v371 = vpack.c.b16 %v354, %v353
        %v372 = vpack.c.b16 %v356, %v355
        %v381 = vunpack.c.l.b16 %v285
        %v382 = vunpack.c.l.b16 %v286
        %v383 = vunpack.c.l.b16 %v287
        %v384 = vunpack.c.l.b16 %v288
        %v385 = vunpack.c.l.b16 %v289
        %v386 = vunpack.c.l.b16 %v290
        %v387 = vunpack.c.l.b16 %v291
        %v388 = vunpack.c.l.b16 %v292
        %v389 = vpack.c.b16 %v382, %v381
        %v390 = vpack.c.b16 %v384, %v383
        %v391 = vpack.c.b16 %v386, %v385
        %v392 = vpack.c.b16 %v388, %v387
        %vm397 = vcmask 523264
        %v399 = vsel %vm397, %v357, 0
        %v402 = vsel %vm397, %v358, 0
        %v405 = vsel %vm397, %v359, 0
        %v408 = vsel %vm397, %v360, 0
        %v411 = vsel %vm397, %v361, 0
        %v414 = vsel %vm397, %v362, 0
        %v417 = vsel %vm397, %v363, 0
        %v420 = vsel %vm397, %v364, 0
        %v423 = vsel %vm397, %v365, 0
        %v426 = vsel %vm397, %v366, 0
        %v429 = vsel %vm397, %v367, 0
        %v432 = vsel %vm397, %v368, 0
        %v435 = vsel %vm397, %v369, 0
        %v438 = vsel %vm397, %v370, 0
        %v441 = vsel %vm397, %v371, 0
        %v444 = vsel %vm397, %v372, 0
        %446 = vmatprep.subr.bf16.mxu0 0
        %447 = vmatpush1.bf16.msra.mxu0 %v389
        %448 = vmatprep.subr.bf16.mxu0 0
        %449 = vmatpush1.bf16.msra.mxu0 %v390
        %450 = vmatprep.subr.bf16.mxu0 0
        %451 = vmatpush1.bf16.msra.mxu0 %v391
        %452 = vmatprep.subr.bf16.mxu0 0
        %453 = vmatpush1.bf16.msra.mxu0 %v392
        %454 = vmatprep.subr.bf16.mxu0 0
        %455 = vmatpush1.bf16.msra.mxu0 0
        %456 = vmatprep.subr.bf16.mxu0 0
        %457 = vmatpush1.bf16.msra.mxu0 0
        %458 = vmatprep.subr.bf16.mxu0 0
        %459 = vmatpush1.bf16.msra.mxu0 0
        %460 = vmatprep.subr.bf16.mxu0 0
        %461 = vmatpush1.bf16.msra.mxu0 0
        %462 = vmatprep.subr.bf16.mxu0 0
        %463 = vmatpush1.bf16.msra.mxu0 0
        %464 = vmatprep.subr.bf16.mxu0 0
        %465 = vmatpush1.bf16.msra.mxu0 0
        %466 = vmatprep.subr.bf16.mxu0 0
        %467 = vmatpush1.bf16.msra.mxu0 0
        %468 = vmatprep.subr.bf16.mxu0 0
        %469 = vmatpush1.bf16.msra.mxu0 0
        %470 = vmatprep.subr.bf16.mxu0 0
        %471 = vmatpush1.bf16.msra.mxu0 0
        %472 = vmatprep.subr.bf16.mxu0 0
        %473 = vmatpush1.bf16.msra.mxu0 0
        %474 = vmatprep.subr.bf16.mxu0 0
        %475 = vmatpush1.bf16.msra.mxu0 0
        %476 = vmatprep.subr.bf16.mxu0 0
        %477 = vmatpush1.bf16.msra.mxu0 0
        %478 = vmatprep.mubr.bf16.mxu0 0
        %479 = vmatmul.mubr.bf16.gmra.mrb[0].mxu0 %v399
        %v480 = vpop.f32.mrb[0].mxu0
        %v481 = vadd.f32 0.0, %v480
        %v482 = vpop.f32.mrb[0].mxu0
        %v483 = vpop.f32.mrb[0].mxu0
        %v484 = vadd.f32 0.0, %v483
        %v485 = vpop.f32.mrb[0].mxu0
        %486 = vmatprep.mubr.bf16.mxu0 0
        %487 = vmatmul.mubr.bf16.gmra.mrb[0].mxu0 %v402
        %v488 = vpop.f32.mrb[0].mxu0
        %v489 = vadd.f32 0.0, %v488
        %v490 = vpop.f32.mrb[0].mxu0
        %v491 = vpop.f32.mrb[0].mxu0
        %v492 = vadd.f32 0.0, %v491
        %v493 = vpop.f32.mrb[0].mxu0
        %494 = vmatprep.mubr.bf16.mxu0 0
        %495 = vmatmul.mubr.bf16.gmra.mrb[0].mxu0 %v405
        %v496 = vpop.f32.mrb[0].mxu0
        %v497 = vadd.f32 0.0, %v496
        %v498 = vpop.f32.mrb[0].mxu0
        %v499 = vpop.f32.mrb[0].mxu0
        %v500 = vadd.f32 0.0, %v499
        %v501 = vpop.f32.mrb[0].mxu0
        %502 = vmatprep.mubr.bf16.mxu0 0
        %503 = vmatmul.mubr.bf16.gmra.mrb[0].mxu0 %v408
        %v504 = vpop.f32.mrb[0].mxu0
        %v505 = vadd.f32 0.0, %v504
        %v506 = vpop.f32.mrb[0].mxu0
        %v507 = vpop.f32.mrb[0].mxu0
        %v508 = vadd.f32 0.0, %v507
        %v509 = vpop.f32.mrb[0].mxu0
        %510 = vmatprep.mubr.bf16.mxu0 0
        %511 = vmatmul.mubr.bf16.gmra.mrb[0].mxu0 %v411
        %v512 = vpop.f32.mrb[0].mxu0
        %v513 = vadd.f32 0.0, %v512
        %v514 = vpop.f32.mrb[0].mxu0
        %v515 = vpop.f32.mrb[0].mxu0
        %v516 = vadd.f32 0.0, %v515
        %v517 = vpop.f32.mrb[0].mxu0
        %518 = vmatprep.mubr.bf16.mxu0 0
        %519 = vmatmul.mubr.bf16.gmra.mrb[0].mxu0 %v414
        %v520 = vpop.f32.mrb[0].mxu0
        %v521 = vadd.f32 0.0, %v520
        %v522 = vpop.f32.mrb[0].mxu0
        %v523 = vpop.f32.mrb[0].mxu0
        %v524 = vadd.f32 0.0, %v523
        %v525 = vpop.f32.mrb[0].mxu0
        %526 = vmatprep.mubr.bf16.mxu0 0
        %527 = vmatmul.mubr.bf16.gmra.mrb[0].mxu0 %v417
        %v528 = vpop.f32.mrb[0].mxu0
        %v529 = vadd.f32 0.0, %v528
        %v530 = vpop.f32.mrb[0].mxu0
        %v531 = vpop.f32.mrb[0].mxu0
        %v532 = vadd.f32 0.0, %v531
        %v533 = vpop.f32.mrb[0].mxu0
        %534 = vmatprep.mubr.bf16.mxu0 0
        %535 = vmatmul.mubr.bf16.gmra.mrb[0].mxu0 %v420
        %v536 = vpop.f32.mrb[0].mxu0
        %v537 = vadd.f32 0.0, %v536
        %v538 = vpop.f32.mrb[0].mxu0
        %v539 = vpop.f32.mrb[0].mxu0
        %v540 = vadd.f32 0.0, %v539
        %v541 = vpop.f32.mrb[0].mxu0
        %542 = vmatprep.mubr.bf16.mxu0 0
        %543 = vmatmul.mubr.bf16.gmra.mrb[0].mxu0 %v423
        %v544 = vpop.f32.mrb[0].mxu0
        %v545 = vadd.f32 0.0, %v544
        %v546 = vpop.f32.mrb[0].mxu0
        %v547 = vpop.f32.mrb[0].mxu0
        %v548 = vadd.f32 0.0, %v547
        %v549 = vpop.f32.mrb[0].mxu0
        %550 = vmatprep.mubr.bf16.mxu0 0
        %551 = vmatmul.mubr.bf16.gmra.mrb[0].mxu0 %v426
        %v552 = vpop.f32.mrb[0].mxu0
        %v553 = vadd.f32 0.0, %v552
        %v554 = vpop.f32.mrb[0].mxu0
        %v555 = vpop.f32.mrb[0].mxu0
        %v556 = vadd.f32 0.0, %v555
        %v557 = vpop.f32.mrb[0].mxu0
        %558 = vmatprep.mubr.bf16.mxu0 0
        %559 = vmatmul.mubr.bf16.gmra.mrb[0].mxu0 %v429
        %v560 = vpop.f32.mrb[0].mxu0
        %v561 = vadd.f32 0.0, %v560
        %v562 = vpop.f32.mrb[0].mxu0
        %v563 = vpop.f32.mrb[0].mxu0
        %v564 = vadd.f32 0.0, %v563
        %v565 = vpop.f32.mrb[0].mxu0
        %566 = vmatprep.mubr.bf16.mxu0 0
        %567 = vmatmul.mubr.bf16.gmra.mrb[0].mxu0 %v432
        %v568 = vpop.f32.mrb[0].mxu0
        %v569 = vadd.f32 0.0, %v568
        %v570 = vpop.f32.mrb[0].mxu0
        %v571 = vpop.f32.mrb[0].mxu0
        %v572 = vadd.f32 0.0, %v571
        %v573 = vpop.f32.mrb[0].mxu0
        %574 = vmatprep.mubr.bf16.mxu0 0
        %575 = vmatmul.mubr.bf16.gmra.mrb[0].mxu0 %v435
        %v576 = vpop.f32.mrb[0].mxu0
        %v577 = vadd.f32 0.0, %v576
        %v578 = vpop.f32.mrb[0].mxu0
        %v579 = vpop.f32.mrb[0].mxu0
        %v580 = vadd.f32 0.0, %v579
        %v581 = vpop.f32.mrb[0].mxu0
        %582 = vmatprep.mubr.bf16.mxu0 0
        %583 = vmatmul.mubr.bf16.gmra.mrb[0].mxu0 %v438
        %v584 = vpop.f32.mrb[0].mxu0
        %v585 = vadd.f32 0.0, %v584
        %v586 = vpop.f32.mrb[0].mxu0
        %v587 = vpop.f32.mrb[0].mxu0
        %v588 = vadd.f32 0.0, %v587
        %v589 = vpop.f32.mrb[0].mxu0
        %590 = vmatprep.mubr.bf16.mxu0 0
        %591 = vmatmul.mubr.bf16.gmra.mrb[0].mxu0 %v441
        %v592 = vpop.f32.mrb[0].mxu0
        %v593 = vadd.f32 0.0, %v592
        %v594 = vpop.f32.mrb[0].mxu0
        %v595 = vpop.f32.mrb[0].mxu0
        %v596 = vadd.f32 0.0, %v595
        %v597 = vpop.f32.mrb[0].mxu0
        %598 = vmatprep.mubr.bf16.mxu0 0
        %599 = vmatmul.mubr.bf16.gmra.mrb[0].mxu0 %v444
        %v600 = vpop.f32.mrb[0].mxu0
        %v601 = vadd.f32 0.0, %v600
        %v602 = vpop.f32.mrb[0].mxu0
        %v603 = vpop.f32.mrb[0].mxu0
        %v604 = vadd.f32 0.0, %v603
        %v605 = vpop.f32.mrb[0].mxu0
        %606 = vdwg.mxu0
        %v639 = vunpack.c.l.b16 %v172
        %v640 = vunpack.c.l.b16 %v173
        %v641 = vunpack.c.l.b16 %v174
        %v642 = vunpack.c.l.b16 %v175
        %v643 = vunpack.c.l.b16 %v176
        %v644 = vunpack.c.l.b16 %v177
        %v645 = vunpack.c.l.b16 %v178
        %v646 = vunpack.c.l.b16 %v179
        %v647 = vunpack.c.l.b16 %v180
        %v648 = vunpack.c.l.b16 %v181
        %v649 = vunpack.c.l.b16 %v182
        %v650 = vunpack.c.l.b16 %v183
        %v651 = vunpack.c.l.b16 %v184
        %v652 = vunpack.c.l.b16 %v185
        %v653 = vunpack.c.l.b16 %v186
        %v654 = vunpack.c.l.b16 %v187
        %v655 = vunpack.c.l.b16 %v188
        %v656 = vunpack.c.l.b16 %v189
        %v657 = vunpack.c.l.b16 %v190
        %v658 = vunpack.c.l.b16 %v191
        %v659 = vunpack.c.l.b16 %v192
        %v660 = vunpack.c.l.b16 %v193
        %v661 = vunpack.c.l.b16 %v194
        %v662 = vunpack.c.l.b16 %v195
        %v663 = vunpack.c.l.b16 %v196
        %v664 = vunpack.c.l.b16 %v197
        %v665 = vunpack.c.l.b16 %v198
        %v666 = vunpack.c.l.b16 %v199
        %v667 = vunpack.c.l.b16 %v200
        %v668 = vunpack.c.l.b16 %v201
        %v669 = vunpack.c.l.b16 %v202
        %v670 = vunpack.c.l.b16 %v203
        %v671 = vpack.c.b16 %v640, %v639
        %v672 = vpack.c.b16 %v642, %v641
        %v673 = vpack.c.b16 %v644, %v643
        %v674 = vpack.c.b16 %v646, %v645
        %v675 = vpack.c.b16 %v648, %v647
        %v676 = vpack.c.b16 %v650, %v649
        %v677 = vpack.c.b16 %v652, %v651
        %v678 = vpack.c.b16 %v654, %v653
        %v679 = vpack.c.b16 %v656, %v655
        %v680 = vpack.c.b16 %v658, %v657
        %v681 = vpack.c.b16 %v660, %v659
        %v682 = vpack.c.b16 %v662, %v661
        %v683 = vpack.c.b16 %v664, %v663
        %v684 = vpack.c.b16 %v666, %v665
        %v685 = vpack.c.b16 %v668, %v667
        %v686 = vpack.c.b16 %v670, %v669
        %v695 = vunpack.c.l.b16 %v276
        %v696 = vunpack.c.l.b16 %v277
        %v697 = vunpack.c.l.b16 %v278
        %v698 = vunpack.c.l.b16 %v279
        %v699 = vunpack.c.l.b16 %v280
        %v700 = vunpack.c.l.b16 %v281
        %v701 = vunpack.c.l.b16 %v282
        %v702 = vunpack.c.l.b16 %v283
        %v703 = vpack.c.b16 %v696, %v695
        %v704 = vpack.c.b16 %v698, %v697
        %v705 = vpack.c.b16 %v700, %v699
        %v706 = vpack.c.b16 %v702, %v701
        %v712 = vsel %vm397, %v671, 0
        %v715 = vsel %vm397, %v672, 0
        %v718 = vsel %vm397, %v673, 0
        %v721 = vsel %vm397, %v674, 0
        %v724 = vsel %vm397, %v675, 0
        %v727 = vsel %vm397, %v676, 0
        %v730 = vsel %vm397, %v677, 0
        %v733 = vsel %vm397, %v678, 0
        %v736 = vsel %vm397, %v679, 0
        %v739 = vsel %vm397, %v680, 0
        %v742 = vsel %vm397, %v681, 0
        %v745 = vsel %vm397, %v682, 0
        %v748 = vsel %vm397, %v683, 0
        %v751 = vsel %vm397, %v684, 0
        %v754 = vsel %vm397, %v685, 0
        %v757 = vsel %vm397, %v686, 0
        %759 = vmatprep.subr.bf16.mxu0 0
        %760 = vmatpush1.bf16.msra.mxu0 %v703
        %761 = vmatprep.subr.bf16.mxu0 0
        %762 = vmatpush1.bf16.msra.mxu0 %v704
        %763 = vmatprep.subr.bf16.mxu0 0
        %764 = vmatpush1.bf16.msra.mxu0 %v705
        %765 = vmatprep.subr.bf16.mxu0 0
        %766 = vmatpush1.bf16.msra.mxu0 %v706
        %767 = vmatprep.subr.bf16.mxu0 0
        %768 = vmatpush1.bf16.msra.mxu0 0
        %769 = vmatprep.subr.bf16.mxu0 0
        %770 = vmatpush1.bf16.msra.mxu0 0
        %771 = vmatprep.subr.bf16.mxu0 0
        %772 = vmatpush1.bf16.msra.mxu0 0
        %773 = vmatprep.subr.bf16.mxu0 0
        %774 = vmatpush1.bf16.msra.mxu0 0
        %775 = vmatprep.subr.bf16.mxu0 0
        %776 = vmatpush1.bf16.msra.mxu0 0
        %777 = vmatprep.subr.bf16.mxu0 0
        %778 = vmatpush1.bf16.msra.mxu0 0
        %779 = vmatprep.subr.bf16.mxu0 0
        %780 = vmatpush1.bf16.msra.mxu0 0
        %781 = vmatprep.subr.bf16.mxu0 0
        %782 = vmatpush1.bf16.msra.mxu0 0
        %783 = vmatprep.subr.bf16.mxu0 0
        %784 = vmatpush1.bf16.msra.mxu0 0
        %785 = vmatprep.subr.bf16.mxu0 0
        %786 = vmatpush1.bf16.msra.mxu0 0
        %787 = vmatprep.subr.bf16.mxu0 0
        %788 = vmatpush1.bf16.msra.mxu0 0
        %789 = vmatprep.subr.bf16.mxu0 0
        %790 = vmatpush1.bf16.msra.mxu0 0
        %791 = vmatprep.mubr.bf16.mxu0 0
        %792 = vmatmul.mubr.bf16.gmra.mrb[0].mxu0 %v712
        %v793 = vpop.f32.mrb[0].mxu0
        %v794 = vadd.f32 %v481, %v793
        %v795 = vpop.f32.mrb[0].mxu0
        %v796 = vpop.f32.mrb[0].mxu0
        %v797 = vadd.f32 %v484, %v796
        %v798 = vpop.f32.mrb[0].mxu0
        %799 = vmatprep.mubr.bf16.mxu0 0
        %800 = vmatmul.mubr.bf16.gmra.mrb[0].mxu0 %v715
        %v801 = vpop.f32.mrb[0].mxu0
        %v802 = vadd.f32 %v489, %v801
        %v803 = vpop.f32.mrb[0].mxu0
        %v804 = vpop.f32.mrb[0].mxu0
        %v805 = vadd.f32 %v492, %v804
        %v806 = vpop.f32.mrb[0].mxu0
        %807 = vmatprep.mubr.bf16.mxu0 0
        %808 = vmatmul.mubr.bf16.gmra.mrb[0].mxu0 %v718
        %v809 = vpop.f32.mrb[0].mxu0
        %v810 = vadd.f32 %v497, %v809
        %v811 = vpop.f32.mrb[0].mxu0
        %v812 = vpop.f32.mrb[0].mxu0
        %v813 = vadd.f32 %v500, %v812
        %v814 = vpop.f32.mrb[0].mxu0
        %815 = vmatprep.mubr.bf16.mxu0 0
        %816 = vmatmul.mubr.bf16.gmra.mrb[0].mxu0 %v721
        %v817 = vpop.f32.mrb[0].mxu0
        %v818 = vadd.f32 %v505, %v817
        %v819 = vpop.f32.mrb[0].mxu0
        %v820 = vpop.f32.mrb[0].mxu0
        %v821 = vadd.f32 %v508, %v820
        %v822 = vpop.f32.mrb[0].mxu0
        %823 = vmatprep.mubr.bf16.mxu0 0
        %824 = vmatmul.mubr.bf16.gmra.mrb[0].mxu0 %v724
        %v825 = vpop.f32.mrb[0].mxu0
        %v826 = vadd.f32 %v513, %v825
        %v827 = vpop.f32.mrb[0].mxu0
        %v828 = vpop.f32.mrb[0].mxu0
        %v829 = vadd.f32 %v516, %v828
        %v830 = vpop.f32.mrb[0].mxu0
        %831 = vmatprep.mubr.bf16.mxu0 0
        %832 = vmatmul.mubr.bf16.gmra.mrb[0].mxu0 %v727
        %v833 = vpop.f32.mrb[0].mxu0
        %v834 = vadd.f32 %v521, %v833
        %v835 = vpop.f32.mrb[0].mxu0
        %v836 = vpop.f32.mrb[0].mxu0
        %v837 = vadd.f32 %v524, %v836
        %v838 = vpop.f32.mrb[0].mxu0
        %839 = vmatprep.mubr.bf16.mxu0 0
        %840 = vmatmul.mubr.bf16.gmra.mrb[0].mxu0 %v730
        %v841 = vpop.f32.mrb[0].mxu0
        %v842 = vadd.f32 %v529, %v841
        %v843 = vpop.f32.mrb[0].mxu0
        %v844 = vpop.f32.mrb[0].mxu0
        %v845 = vadd.f32 %v532, %v844
        %v846 = vpop.f32.mrb[0].mxu0
        %847 = vmatprep.mubr.bf16.mxu0 0
        %848 = vmatmul.mubr.bf16.gmra.mrb[0].mxu0 %v733
        %v849 = vpop.f32.mrb[0].mxu0
        %v850 = vadd.f32 %v537, %v849
        %v851 = vpop.f32.mrb[0].mxu0
        %v852 = vpop.f32.mrb[0].mxu0
        %v853 = vadd.f32 %v540, %v852
        %v854 = vpop.f32.mrb[0].mxu0
        %855 = vmatprep.mubr.bf16.mxu0 0
        %856 = vmatmul.mubr.bf16.gmra.mrb[0].mxu0 %v736
        %v857 = vpop.f32.mrb[0].mxu0
        %v858 = vadd.f32 %v545, %v857
        %v859 = vpop.f32.mrb[0].mxu0
        %v860 = vpop.f32.mrb[0].mxu0
        %v861 = vadd.f32 %v548, %v860
        %v862 = vpop.f32.mrb[0].mxu0
        %863 = vmatprep.mubr.bf16.mxu0 0
        %864 = vmatmul.mubr.bf16.gmra.mrb[0].mxu0 %v739
        %v865 = vpop.f32.mrb[0].mxu0
        %v866 = vadd.f32 %v553, %v865
        %v867 = vpop.f32.mrb[0].mxu0
        %v868 = vpop.f32.mrb[0].mxu0
        %v869 = vadd.f32 %v556, %v868
        %v870 = vpop.f32.mrb[0].mxu0
        %871 = vmatprep.mubr.bf16.mxu0 0
        %872 = vmatmul.mubr.bf16.gmra.mrb[0].mxu0 %v742
        %v873 = vpop.f32.mrb[0].mxu0
        %v874 = vadd.f32 %v561, %v873
        %v875 = vpop.f32.mrb[0].mxu0
        %v876 = vpop.f32.mrb[0].mxu0
        %v877 = vadd.f32 %v564, %v876
        %v878 = vpop.f32.mrb[0].mxu0
        %879 = vmatprep.mubr.bf16.mxu0 0
        %880 = vmatmul.mubr.bf16.gmra.mrb[0].mxu0 %v745
        %v881 = vpop.f32.mrb[0].mxu0
        %v882 = vadd.f32 %v569, %v881
        %v883 = vpop.f32.mrb[0].mxu0
        %v884 = vpop.f32.mrb[0].mxu0
        %v885 = vadd.f32 %v572, %v884
        %v886 = vpop.f32.mrb[0].mxu0
        %887 = vmatprep.mubr.bf16.mxu0 0
        %888 = vmatmul.mubr.bf16.gmra.mrb[0].mxu0 %v748
        %v889 = vpop.f32.mrb[0].mxu0
        %v890 = vadd.f32 %v577, %v889
        %v891 = vpop.f32.mrb[0].mxu0
        %v892 = vpop.f32.mrb[0].mxu0
        %v893 = vadd.f32 %v580, %v892
        %v894 = vpop.f32.mrb[0].mxu0
        %895 = vmatprep.mubr.bf16.mxu0 0
        %896 = vmatmul.mubr.bf16.gmra.mrb[0].mxu0 %v751
        %v897 = vpop.f32.mrb[0].mxu0
        %v898 = vadd.f32 %v585, %v897
        %v899 = vpop.f32.mrb[0].mxu0
        %v900 = vpop.f32.mrb[0].mxu0
        %v901 = vadd.f32 %v588, %v900
        %v902 = vpop.f32.mrb[0].mxu0
        %903 = vmatprep.mubr.bf16.mxu0 0
        %904 = vmatmul.mubr.bf16.gmra.mrb[0].mxu0 %v754
        %v905 = vpop.f32.mrb[0].mxu0
        %v906 = vadd.f32 %v593, %v905
        %v907 = vpop.f32.mrb[0].mxu0
        %v908 = vpop.f32.mrb[0].mxu0
        %v909 = vadd.f32 %v596, %v908
        %v910 = vpop.f32.mrb[0].mxu0
        %911 = vmatprep.mubr.bf16.mxu0 0
        %912 = vmatmul.mubr.bf16.gmra.mrb[0].mxu0 %v757
        %v913 = vpop.f32.mrb[0].mxu0
        %v914 = vadd.f32 %v601, %v913
        %v915 = vpop.f32.mrb[0].mxu0
        %v916 = vpop.f32.mrb[0].mxu0
        %v917 = vadd.f32 %v604, %v916
        %v918 = vpop.f32.mrb[0].mxu0
        %919 = vdwg.mxu0
        %s920 = scalar_lea.vmem [#allocation2], 192
        %v921 = vld [vmem:[%s920] sm:$0xf]
        %v922 = vld [vmem:[%s920 + $0x4] sm:$0xf]
        %v923 = vld [vmem:[%s920 + $0x8] sm:$0xf]
        %v924 = vld [vmem:[%s920 + $0xc] sm:$0xf]
        %v925 = vld [vmem:[%s920 + $0x10] sm:$0xf]
        %v926 = vld [vmem:[%s920 + $0x14] sm:$0xf]
        %v927 = vld [vmem:[%s920 + $0x18] sm:$0xf]
        %v928 = vld [vmem:[%s920 + $0x1c] sm:$0xf]
        %v961 = vunpack.c.l.b16 %v244
        %v962 = vunpack.c.l.b16 %v245
        %v963 = vunpack.c.l.b16 %v246
        %v964 = vunpack.c.l.b16 %v247
        %v965 = vunpack.c.l.b16 %v248
        %v966 = vunpack.c.l.b16 %v249
        %v967 = vunpack.c.l.b16 %v250
        %v968 = vunpack.c.l.b16 %v251
        %v969 = vunpack.c.l.b16 %v252
        %v970 = vunpack.c.l.b16 %v253
        %v971 = vunpack.c.l.b16 %v254
        %v972 = vunpack.c.l.b16 %v255
        %v973 = vunpack.c.l.b16 %v256
        %v974 = vunpack.c.l.b16 %v257
        %v975 = vunpack.c.l.b16 %v258
        %v976 = vunpack.c.l.b16 %v259
        %v977 = vunpack.c.l.b16 %v260
        %v978 = vunpack.c.l.b16 %v261
        %v979 = vunpack.c.l.b16 %v262
        %v980 = vunpack.c.l.b16 %v263
        %v981 = vunpack.c.l.b16 %v264
        %v982 = vunpack.c.l.b16 %v265
        %v983 = vunpack.c.l.b16 %v266
        %v984 = vunpack.c.l.b16 %v267
        %v985 = vunpack.c.l.b16 %v268
        %v986 = vunpack.c.l.b16 %v269
        %v987 = vunpack.c.l.b16 %v270
        %v988 = vunpack.c.l.b16 %v271
        %v989 = vunpack.c.l.b16 %v272
        %v990 = vunpack.c.l.b16 %v273
        %v991 = vunpack.c.l.b16 %v274
        %v992 = vunpack.c.l.b16 %v275
        %v993 = vpack.c.b16 %v962, %v961
        %v994 = vpack.c.b16 %v964, %v963
        %v995 = vpack.c.b16 %v966, %v965
        %v996 = vpack.c.b16 %v968, %v967
        %v997 = vpack.c.b16 %v970, %v969
        %v998 = vpack.c.b16 %v972, %v971
        %v999 = vpack.c.b16 %v974, %v973
        %v1000 = vpack.c.b16 %v976, %v975
        %v1001 = vpack.c.b16 %v978, %v977
        %v1002 = vpack.c.b16 %v980, %v979
        %v1003 = vpack.c.b16 %v982, %v981
        %v1004 = vpack.c.b16 %v984, %v983
        %v1005 = vpack.c.b16 %v986, %v985
        %v1006 = vpack.c.b16 %v988, %v987
        %v1007 = vpack.c.b16 %v990, %v989
        %v1008 = vpack.c.b16 %v992, %v991
        %v1017 = vunpack.c.l.b16 %v921
        %v1018 = vunpack.c.l.b16 %v922
        %v1019 = vunpack.c.l.b16 %v923
        %v1020 = vunpack.c.l.b16 %v924
        %v1021 = vunpack.c.l.b16 %v925
        %v1022 = vunpack.c.l.b16 %v926
        %v1023 = vunpack.c.l.b16 %v927
        %v1024 = vunpack.c.l.b16 %v928
        %v1025 = vpack.c.b16 %v1018, %v1017
        %v1026 = vpack.c.b16 %v1020, %v1019
        %v1027 = vpack.c.b16 %v1022, %v1021
        %v1028 = vpack.c.b16 %v1024, %v1023
        %v1034 = vsel %vm397, %v993, 0
        %v1037 = vsel %vm397, %v994, 0
        %v1040 = vsel %vm397, %v995, 0
        %v1043 = vsel %vm397, %v996, 0
        %v1046 = vsel %vm397, %v997, 0
        %v1049 = vsel %vm397, %v998, 0
        %v1052 = vsel %vm397, %v999, 0
        %v1055 = vsel %vm397, %v1000, 0
        %v1058 = vsel %vm397, %v1001, 0
        %v1061 = vsel %vm397, %v1002, 0
        %v1064 = vsel %vm397, %v1003, 0
        %v1067 = vsel %vm397, %v1004, 0
        %v1070 = vsel %vm397, %v1005, 0
        %v1073 = vsel %vm397, %v1006, 0
        %v1076 = vsel %vm397, %v1007, 0
        %v1079 = vsel %vm397, %v1008, 0
        %1081 = vmatprep.subr.bf16.mxu0 0
        %1082 = vmatpush1.bf16.msra.mxu0 %v1025
        %1083 = vmatprep.subr.bf16.mxu0 0
        %1084 = vmatpush1.bf16.msra.mxu0 %v1026
        %1085 = vmatprep.subr.bf16.mxu0 0
        %1086 = vmatpush1.bf16.msra.mxu0 %v1027
        %1087 = vmatprep.subr.bf16.mxu0 0
        %1088 = vmatpush1.bf16.msra.mxu0 %v1028
        %1089 = vmatprep.subr.bf16.mxu0 0
        %1090 = vmatpush1.bf16.msra.mxu0 0
        %1091 = vmatprep.subr.bf16.mxu0 0
        %1092 = vmatpush1.bf16.msra.mxu0 0
        %1093 = vmatprep.subr.bf16.mxu0 0
        %1094 = vmatpush1.bf16.msra.mxu0 0
        %1095 = vmatprep.subr.bf16.mxu0 0
        %1096 = vmatpush1.bf16.msra.mxu0 0
        %1097 = vmatprep.subr.bf16.mxu0 0
        %1098 = vmatpush1.bf16.msra.mxu0 0
        %1099 = vmatprep.subr.bf16.mxu0 0
        %1100 = vmatpush1.bf16.msra.mxu0 0
        %1101 = vmatprep.subr.bf16.mxu0 0
        %1102 = vmatpush1.bf16.msra.mxu0 0
        %1103 = vmatprep.subr.bf16.mxu0 0
        %1104 = vmatpush1.bf16.msra.mxu0 0
        %1105 = vmatprep.subr.bf16.mxu0 0
        %1106 = vmatpush1.bf16.msra.mxu0 0
        %1107 = vmatprep.subr.bf16.mxu0 0
        %1108 = vmatpush1.bf16.msra.mxu0 0
        %1109 = vmatprep.subr.bf16.mxu0 0
        %1110 = vmatpush1.bf16.msra.mxu0 0
        %1111 = vmatprep.subr.bf16.mxu0 0
        %1112 = vmatpush1.bf16.msra.mxu0 0
        %1113 = vmatprep.mubr.bf16.mxu0 0
        %1114 = vmatmul.mubr.bf16.gmra.mrb[0].mxu0 %v1034
        %v1115 = vpop.f32.mrb[0].mxu0
        %v1116 = vadd.f32 0.0, %v1115
        %v1117 = vpop.f32.mrb[0].mxu0
        %v1118 = vpop.f32.mrb[0].mxu0
        %v1119 = vadd.f32 0.0, %v1118
        %v1120 = vpop.f32.mrb[0].mxu0
        %1121 = vmatprep.mubr.bf16.mxu0 0
        %1122 = vmatmul.mubr.bf16.gmra.mrb[0].mxu0 %v1037
        %v1123 = vpop.f32.mrb[0].mxu0
        %v1124 = vadd.f32 0.0, %v1123
        %v1125 = vpop.f32.mrb[0].mxu0
        %v1126 = vpop.f32.mrb[0].mxu0
        %v1127 = vadd.f32 0.0, %v1126
        %v1128 = vpop.f32.mrb[0].mxu0
        %1129 = vmatprep.mubr.bf16.mxu0 0
        %1130 = vmatmul.mubr.bf16.gmra.mrb[0].mxu0 %v1040
        %v1131 = vpop.f32.mrb[0].mxu0
        %v1132 = vadd.f32 0.0, %v1131
        %v1133 = vpop.f32.mrb[0].mxu0
        %v1134 = vpop.f32.mrb[0].mxu0
        %v1135 = vadd.f32 0.0, %v1134
        %v1136 = vpop.f32.mrb[0].mxu0
        %1137 = vmatprep.mubr.bf16.mxu0 0
        %1138 = vmatmul.mubr.bf16.gmra.mrb[0].mxu0 %v1043
        %v1139 = vpop.f32.mrb[0].mxu0
        %v1140 = vadd.f32 0.0, %v1139
        %v1141 = vpop.f32.mrb[0].mxu0
        %v1142 = vpop.f32.mrb[0].mxu0
        %v1143 = vadd.f32 0.0, %v1142
        %v1144 = vpop.f32.mrb[0].mxu0
        %1145 = vmatprep.mubr.bf16.mxu0 0
        %1146 = vmatmul.mubr.bf16.gmra.mrb[0].mxu0 %v1046
        %v1147 = vpop.f32.mrb[0].mxu0
        %v1148 = vadd.f32 0.0, %v1147
        %v1149 = vpop.f32.mrb[0].mxu0
        %v1150 = vpop.f32.mrb[0].mxu0
        %v1151 = vadd.f32 0.0, %v1150
        %v1152 = vpop.f32.mrb[0].mxu0
        %1153 = vmatprep.mubr.bf16.mxu0 0
        %1154 = vmatmul.mubr.bf16.gmra.mrb[0].mxu0 %v1049
        %v1155 = vpop.f32.mrb[0].mxu0
        %v1156 = vadd.f32 0.0, %v1155
        %v1157 = vpop.f32.mrb[0].mxu0
        %v1158 = vpop.f32.mrb[0].mxu0
        %v1159 = vadd.f32 0.0, %v1158
        %v1160 = vpop.f32.mrb[0].mxu0
        %1161 = vmatprep.mubr.bf16.mxu0 0
        %1162 = vmatmul.mubr.bf16.gmra.mrb[0].mxu0 %v1052
        %v1163 = vpop.f32.mrb[0].mxu0
        %v1164 = vadd.f32 0.0, %v1163
        %v1165 = vpop.f32.mrb[0].mxu0
        %v1166 = vpop.f32.mrb[0].mxu0
        %v1167 = vadd.f32 0.0, %v1166
        %v1168 = vpop.f32.mrb[0].mxu0
        %1169 = vmatprep.mubr.bf16.mxu0 0
        %1170 = vmatmul.mubr.bf16.gmra.mrb[0].mxu0 %v1055
        %v1171 = vpop.f32.mrb[0].mxu0
        %v1172 = vadd.f32 0.0, %v1171
        %v1173 = vpop.f32.mrb[0].mxu0
        %v1174 = vpop.f32.mrb[0].mxu0
        %v1175 = vadd.f32 0.0, %v1174
        %v1176 = vpop.f32.mrb[0].mxu0
        %1177 = vmatprep.mubr.bf16.mxu0 0
        %1178 = vmatmul.mubr.bf16.gmra.mrb[0].mxu0 %v1058
        %v1179 = vpop.f32.mrb[0].mxu0
        %v1180 = vadd.f32 0.0, %v1179
        %v1181 = vpop.f32.mrb[0].mxu0
        %v1182 = vpop.f32.mrb[0].mxu0
        %v1183 = vadd.f32 0.0, %v1182
        %v1184 = vpop.f32.mrb[0].mxu0
        %1185 = vmatprep.mubr.bf16.mxu0 0
        %1186 = vmatmul.mubr.bf16.gmra.mrb[0].mxu0 %v1061
        %v1187 = vpop.f32.mrb[0].mxu0
        %v1188 = vadd.f32 0.0, %v1187
        %v1189 = vpop.f32.mrb[0].mxu0
        %v1190 = vpop.f32.mrb[0].mxu0
        %v1191 = vadd.f32 0.0, %v1190
        %v1192 = vpop.f32.mrb[0].mxu0
        %1193 = vmatprep.mubr.bf16.mxu0 0
        %1194 = vmatmul.mubr.bf16.gmra.mrb[0].mxu0 %v1064
        %v1195 = vpop.f32.mrb[0].mxu0
        %v1196 = vadd.f32 0.0, %v1195
        %v1197 = vpop.f32.mrb[0].mxu0
        %v1198 = vpop.f32.mrb[0].mxu0
        %v1199 = vadd.f32 0.0, %v1198
        %v1200 = vpop.f32.mrb[0].mxu0
        %1201 = vmatprep.mubr.bf16.mxu0 0
        %1202 = vmatmul.mubr.bf16.gmra.mrb[0].mxu0 %v1067
        %v1203 = vpop.f32.mrb[0].mxu0
        %v1204 = vadd.f32 0.0, %v1203
        %v1205 = vpop.f32.mrb[0].mxu0
        %v1206 = vpop.f32.mrb[0].mxu0
        %v1207 = vadd.f32 0.0, %v1206
        %v1208 = vpop.f32.mrb[0].mxu0
        %1209 = vmatprep.mubr.bf16.mxu0 0
        %1210 = vmatmul.mubr.bf16.gmra.mrb[0].mxu0 %v1070
        %v1211 = vpop.f32.mrb[0].mxu0
        %v1212 = vadd.f32 0.0, %v1211
        %v1213 = vpop.f32.mrb[0].mxu0
        %v1214 = vpop.f32.mrb[0].mxu0
        %v1215 = vadd.f32 0.0, %v1214
        %v1216 = vpop.f32.mrb[0].mxu0
        %1217 = vmatprep.mubr.bf16.mxu0 0
        %1218 = vmatmul.mubr.bf16.gmra.mrb[0].mxu0 %v1073
        %v1219 = vpop.f32.mrb[0].mxu0
        %v1220 = vadd.f32 0.0, %v1219
        %v1221 = vpop.f32.mrb[0].mxu0
        %v1222 = vpop.f32.mrb[0].mxu0
        %v1223 = vadd.f32 0.0, %v1222
        %v1224 = vpop.f32.mrb[0].mxu0
        %1225 = vmatprep.mubr.bf16.mxu0 0
        %1226 = vmatmul.mubr.bf16.gmra.mrb[0].mxu0 %v1076
        %v1227 = vpop.f32.mrb[0].mxu0
        %v1228 = vadd.f32 0.0, %v1227
        %v1229 = vpop.f32.mrb[0].mxu0
        %v1230 = vpop.f32.mrb[0].mxu0
        %v1231 = vadd.f32 0.0, %v1230
        %v1232 = vpop.f32.mrb[0].mxu0
        %1233 = vmatprep.mubr.bf16.mxu0 0
        %1234 = vmatmul.mubr.bf16.gmra.mrb[0].mxu0 %v1079
        %v1235 = vpop.f32.mrb[0].mxu0
        %v1236 = vadd.f32 0.0, %v1235
        %v1237 = vpop.f32.mrb[0].mxu0
        %v1238 = vpop.f32.mrb[0].mxu0
        %v1239 = vadd.f32 0.0, %v1238
        %v1240 = vpop.f32.mrb[0].mxu0
        %1241 = vdwg.mxu0
        %v1242 = vadd.f32 %v794, %v1116
        %v1243 = vadd.f32 %v797, %v1119
        %v1244 = vadd.f32 %v802, %v1124
        %v1245 = vadd.f32 %v805, %v1127
        %v1246 = vadd.f32 %v810, %v1132
        %v1247 = vadd.f32 %v813, %v1135
        %v1248 = vadd.f32 %v818, %v1140
        %v1249 = vadd.f32 %v821, %v1143
        %v1250 = vadd.f32 %v826, %v1148
        %v1251 = vadd.f32 %v829, %v1151
        %v1252 = vadd.f32 %v834, %v1156
        %v1253 = vadd.f32 %v837, %v1159
        %v1254 = vadd.f32 %v842, %v1164
        %v1255 = vadd.f32 %v845, %v1167
        %v1256 = vadd.f32 %v850, %v1172
        %v1257 = vadd.f32 %v853, %v1175
        %v1258 = vadd.f32 %v858, %v1180
        %v1259 = vadd.f32 %v861, %v1183
        %v1260 = vadd.f32 %v866, %v1188
        %v1261 = vadd.f32 %v869, %v1191
        %v1262 = vadd.f32 %v874, %v1196
        %v1263 = vadd.f32 %v877, %v1199
        %v1264 = vadd.f32 %v882, %v1204
        %v1265 = vadd.f32 %v885, %v1207
        %v1266 = vadd.f32 %v890, %v1212
        %v1267 = vadd.f32 %v893, %v1215
        %v1268 = vadd.f32 %v898, %v1220
        %v1269 = vadd.f32 %v901, %v1223
        %v1270 = vadd.f32 %v906, %v1228
        %v1271 = vadd.f32 %v909, %v1231
        %v1272 = vadd.f32 %v914, %v1236
        %v1273 = vadd.f32 %v917, %v1239
        %s1274 = scalar_lea.vmem [#allocation2], 32
        %v1275 = vld [vmem:[%s1274] sm:$0xf]
        %v1276 = vld [vmem:[%s1274 + $0x4] sm:$0xf]
        %v1277 = vld [vmem:[%s1274 + $0x8] sm:$0xf]
        %v1278 = vld [vmem:[%s1274 + $0xc] sm:$0xf]
        %v1279 = vld [vmem:[%s1274 + $0x10] sm:$0xf]
        %v1280 = vld [vmem:[%s1274 + $0x14] sm:$0xf]
        %v1281 = vld [vmem:[%s1274 + $0x18] sm:$0xf]
        %v1282 = vld [vmem:[%s1274 + $0x1c] sm:$0xf]
        %s1283 = scalar_lea.vmem [#allocation2], 128
        %v1284 = vld [vmem:[%s1283] sm:$0xf]
        %v1285 = vld [vmem:[%s1283 + $0x4] sm:$0xf]
        %v1286 = vld [vmem:[%s1283 + $0x8] sm:$0xf]
        %v1287 = vld [vmem:[%s1283 + $0xc] sm:$0xf]
        %v1288 = vld [vmem:[%s1283 + $0x10] sm:$0xf]
        %v1289 = vld [vmem:[%s1283 + $0x14] sm:$0xf]
        %v1290 = vld [vmem:[%s1283 + $0x18] sm:$0xf]
        %v1291 = vld [vmem:[%s1283 + $0x1c] sm:$0xf]
        %v1300 = vunpack.c.l.b16 %v1284
        %v1301 = vunpack.c.l.b16 %v1285
        %v1302 = vunpack.c.l.b16 %v1286
        %v1303 = vunpack.c.l.b16 %v1287
        %v1304 = vunpack.c.l.b16 %v1288
        %v1305 = vunpack.c.l.b16 %v1289
        %v1306 = vunpack.c.l.b16 %v1290
        %v1307 = vunpack.c.l.b16 %v1291
        %v1308 = vpack.c.b16 %v1301, %v1300
        %v1309 = vpack.c.b16 %v1303, %v1302
        %v1310 = vpack.c.b16 %v1305, %v1304
        %v1311 = vpack.c.b16 %v1307, %v1306
        %1316 = vmatprep.subr.bf16.mxu0 0
        %1317 = vmatpush1.bf16.msra.mxu0 %v1308
        %1318 = vmatprep.subr.bf16.mxu0 0
        %1319 = vmatpush1.bf16.msra.mxu0 %v1309
        %1320 = vmatprep.subr.bf16.mxu0 0
        %1321 = vmatpush1.bf16.msra.mxu0 %v1310
        %1322 = vmatprep.subr.bf16.mxu0 0
        %1323 = vmatpush1.bf16.msra.mxu0 %v1311
        %1324 = vmatprep.subr.bf16.mxu0 0
        %1325 = vmatpush1.bf16.msra.mxu0 0
        %1326 = vmatprep.subr.bf16.mxu0 0
        %1327 = vmatpush1.bf16.msra.mxu0 0
        %1328 = vmatprep.subr.bf16.mxu0 0
        %1329 = vmatpush1.bf16.msra.mxu0 0
        %1330 = vmatprep.subr.bf16.mxu0 0
        %1331 = vmatpush1.bf16.msra.mxu0 0
        %1332 = vmatprep.subr.bf16.mxu0 0
        %1333 = vmatpush1.bf16.msra.mxu0 0
        %1334 = vmatprep.subr.bf16.mxu0 0
        %1335 = vmatpush1.bf16.msra.mxu0 0
        %1336 = vmatprep.subr.bf16.mxu0 0
        %1337 = vmatpush1.bf16.msra.mxu0 0
        %1338 = vmatprep.subr.bf16.mxu0 0
        %1339 = vmatpush1.bf16.msra.mxu0 0
        %1340 = vmatprep.subr.bf16.mxu0 0
        %1341 = vmatpush1.bf16.msra.mxu0 0
        %1342 = vmatprep.subr.bf16.mxu0 0
        %1343 = vmatpush1.bf16.msra.mxu0 0
        %1344 = vmatprep.subr.bf16.mxu0 0
        %1345 = vmatpush1.bf16.msra.mxu0 0
        %1346 = vmatprep.subr.bf16.mxu0 0
        %1347 = vmatpush1.bf16.msra.mxu0 0
        %1348 = vmatprep.mubr.bf16.mxu0 0
        %1349 = vmatmul.mubr.bf16.gmra.mrb[0].mxu0 %v399
        %v1350 = vpop.f32.mrb[0].mxu0
        %v1351 = vadd.f32 0.0, %v1350
        %v1352 = vpop.f32.mrb[0].mxu0
        %v1353 = vpop.f32.mrb[0].mxu0
        %v1354 = vadd.f32 0.0, %v1353
        %v1355 = vpop.f32.mrb[0].mxu0
        %1356 = vmatprep.mubr.bf16.mxu0 0
        %1357 = vmatmul.mubr.bf16.gmra.mrb[0].mxu0 %v402
        %v1358 = vpop.f32.mrb[0].mxu0
        %v1359 = vadd.f32 0.0, %v1358
        %v1360 = vpop.f32.mrb[0].mxu0
        %v1361 = vpop.f32.mrb[0].mxu0
        %v1362 = vadd.f32 0.0, %v1361
        %v1363 = vpop.f32.mrb[0].mxu0
        %1364 = vmatprep.mubr.bf16.mxu0 0
        %1365 = vmatmul.mubr.bf16.gmra.mrb[0].mxu0 %v405
        %v1366 = vpop.f32.mrb[0].mxu0
        %v1367 = vadd.f32 0.0, %v1366
        %v1368 = vpop.f32.mrb[0].mxu0
        %v1369 = vpop.f32.mrb[0].mxu0
        %v1370 = vadd.f32 0.0, %v1369
        %v1371 = vpop.f32.mrb[0].mxu0
        %1372 = vmatprep.mubr.bf16.mxu0 0
        %1373 = vmatmul.mubr.bf16.gmra.mrb[0].mxu0 %v408
        %v1374 = vpop.f32.mrb[0].mxu0
        %v1375 = vadd.f32 0.0, %v1374
        %v1376 = vpop.f32.mrb[0].mxu0
        %v1377 = vpop.f32.mrb[0].mxu0
        %v1378 = vadd.f32 0.0, %v1377
        %v1379 = vpop.f32.mrb[0].mxu0
        %1380 = vmatprep.mubr.bf16.mxu0 0
        %1381 = vmatmul.mubr.bf16.gmra.mrb[0].mxu0 %v411
        %v1382 = vpop.f32.mrb[0].mxu0
        %v1383 = vadd.f32 0.0, %v1382
        %v1384 = vpop.f32.mrb[0].mxu0
        %v1385 = vpop.f32.mrb[0].mxu0
        %v1386 = vadd.f32 0.0, %v1385
        %v1387 = vpop.f32.mrb[0].mxu0
        %1388 = vmatprep.mubr.bf16.mxu0 0
        %1389 = vmatmul.mubr.bf16.gmra.mrb[0].mxu0 %v414
        %v1390 = vpop.f32.mrb[0].mxu0
        %v1391 = vadd.f32 0.0, %v1390
        %v1392 = vpop.f32.mrb[0].mxu0
        %v1393 = vpop.f32.mrb[0].mxu0
        %v1394 = vadd.f32 0.0, %v1393
        %v1395 = vpop.f32.mrb[0].mxu0
        %1396 = vmatprep.mubr.bf16.mxu0 0
        %1397 = vmatmul.mubr.bf16.gmra.mrb[0].mxu0 %v417
        %v1398 = vpop.f32.mrb[0].mxu0
        %v1399 = vadd.f32 0.0, %v1398
        %v1400 = vpop.f32.mrb[0].mxu0
        %v1401 = vpop.f32.mrb[0].mxu0
        %v1402 = vadd.f32 0.0, %v1401
        %v1403 = vpop.f32.mrb[0].mxu0
        %1404 = vmatprep.mubr.bf16.mxu0 0
        %1405 = vmatmul.mubr.bf16.gmra.mrb[0].mxu0 %v420
        %v1406 = vpop.f32.mrb[0].mxu0
        %v1407 = vadd.f32 0.0, %v1406
        %v1408 = vpop.f32.mrb[0].mxu0
        %v1409 = vpop.f32.mrb[0].mxu0
        %v1410 = vadd.f32 0.0, %v1409
        %v1411 = vpop.f32.mrb[0].mxu0
        %1412 = vmatprep.mubr.bf16.mxu0 0
        %1413 = vmatmul.mubr.bf16.gmra.mrb[0].mxu0 %v423
        %v1414 = vpop.f32.mrb[0].mxu0
        %v1415 = vadd.f32 0.0, %v1414
        %v1416 = vpop.f32.mrb[0].mxu0
        %v1417 = vpop.f32.mrb[0].mxu0
        %v1418 = vadd.f32 0.0, %v1417
        %v1419 = vpop.f32.mrb[0].mxu0
        %1420 = vmatprep.mubr.bf16.mxu0 0
        %1421 = vmatmul.mubr.bf16.gmra.mrb[0].mxu0 %v426
        %v1422 = vpop.f32.mrb[0].mxu0
        %v1423 = vadd.f32 0.0, %v1422
        %v1424 = vpop.f32.mrb[0].mxu0
        %v1425 = vpop.f32.mrb[0].mxu0
        %v1426 = vadd.f32 0.0, %v1425
        %v1427 = vpop.f32.mrb[0].mxu0
        %1428 = vmatprep.mubr.bf16.mxu0 0
        %1429 = vmatmul.mubr.bf16.gmra.mrb[0].mxu0 %v429
        %v1430 = vpop.f32.mrb[0].mxu0
        %v1431 = vadd.f32 0.0, %v1430
        %v1432 = vpop.f32.mrb[0].mxu0
        %v1433 = vpop.f32.mrb[0].mxu0
        %v1434 = vadd.f32 0.0, %v1433
        %v1435 = vpop.f32.mrb[0].mxu0
        %1436 = vmatprep.mubr.bf16.mxu0 0
        %1437 = vmatmul.mubr.bf16.gmra.mrb[0].mxu0 %v432
        %v1438 = vpop.f32.mrb[0].mxu0
        %v1439 = vadd.f32 0.0, %v1438
        %v1440 = vpop.f32.mrb[0].mxu0
        %v1441 = vpop.f32.mrb[0].mxu0
        %v1442 = vadd.f32 0.0, %v1441
        %v1443 = vpop.f32.mrb[0].mxu0
        %1444 = vmatprep.mubr.bf16.mxu0 0
        %1445 = vmatmul.mubr.bf16.gmra.mrb[0].mxu0 %v435
        %v1446 = vpop.f32.mrb[0].mxu0
        %v1447 = vadd.f32 0.0, %v1446
        %v1448 = vpop.f32.mrb[0].mxu0
        %v1449 = vpop.f32.mrb[0].mxu0
        %v1450 = vadd.f32 0.0, %v1449
        %v1451 = vpop.f32.mrb[0].mxu0
        %1452 = vmatprep.mubr.bf16.mxu0 0
        %1453 = vmatmul.mubr.bf16.gmra.mrb[0].mxu0 %v438
        %v1454 = vpop.f32.mrb[0].mxu0
        %v1455 = vadd.f32 0.0, %v1454
        %v1456 = vpop.f32.mrb[0].mxu0
        %v1457 = vpop.f32.mrb[0].mxu0
        %v1458 = vadd.f32 0.0, %v1457
        %v1459 = vpop.f32.mrb[0].mxu0
        %1460 = vmatprep.mubr.bf16.mxu0 0
        %1461 = vmatmul.mubr.bf16.gmra.mrb[0].mxu0 %v441
        %v1462 = vpop.f32.mrb[0].mxu0
        %v1463 = vadd.f32 0.0, %v1462
        %v1464 = vpop.f32.mrb[0].mxu0
        %v1465 = vpop.f32.mrb[0].mxu0
        %v1466 = vadd.f32 0.0, %v1465
        %v1467 = vpop.f32.mrb[0].mxu0
        %1468 = vmatprep.mubr.bf16.mxu0 0
        %1469 = vmatmul.mubr.bf16.gmra.mrb[0].mxu0 %v444
        %v1470 = vpop.f32.mrb[0].mxu0
        %v1471 = vadd.f32 0.0, %v1470
        %v1472 = vpop.f32.mrb[0].mxu0
        %v1473 = vpop.f32.mrb[0].mxu0
        %v1474 = vadd.f32 0.0, %v1473
        %v1475 = vpop.f32.mrb[0].mxu0
        %1476 = vdwg.mxu0
        %v1485 = vunpack.c.l.b16 %v1275
        %v1486 = vunpack.c.l.b16 %v1276
        %v1487 = vunpack.c.l.b16 %v1277
        %v1488 = vunpack.c.l.b16 %v1278
        %v1489 = vunpack.c.l.b16 %v1279
        %v1490 = vunpack.c.l.b16 %v1280
        %v1491 = vunpack.c.l.b16 %v1281
        %v1492 = vunpack.c.l.b16 %v1282
        %v1493 = vpack.c.b16 %v1486, %v1485
        %v1494 = vpack.c.b16 %v1488, %v1487
        %v1495 = vpack.c.b16 %v1490, %v1489
        %v1496 = vpack.c.b16 %v1492, %v1491
        %1501 = vmatprep.subr.bf16.mxu0 0
        %1502 = vmatpush1.bf16.msra.mxu0 %v1493
        %1503 = vmatprep.subr.bf16.mxu0 0
        %1504 = vmatpush1.bf16.msra.mxu0 %v1494
        %1505 = vmatprep.subr.bf16.mxu0 0
        %1506 = vmatpush1.bf16.msra.mxu0 %v1495
        %1507 = vmatprep.subr.bf16.mxu0 0
        %1508 = vmatpush1.bf16.msra.mxu0 %v1496
        %1509 = vmatprep.subr.bf16.mxu0 0
        %1510 = vmatpush1.bf16.msra.mxu0 0
        %1511 = vmatprep.subr.bf16.mxu0 0
        %1512 = vmatpush1.bf16.msra.mxu0 0
        %1513 = vmatprep.subr.bf16.mxu0 0
        %1514 = vmatpush1.bf16.msra.mxu0 0
        %1515 = vmatprep.subr.bf16.mxu0 0
        %1516 = vmatpush1.bf16.msra.mxu0 0
        %1517 = vmatprep.subr.bf16.mxu0 0
        %1518 = vmatpush1.bf16.msra.mxu0 0
        %1519 = vmatprep.subr.bf16.mxu0 0
        %1520 = vmatpush1.bf16.msra.mxu0 0
        %1521 = vmatprep.subr.bf16.mxu0 0
        %1522 = vmatpush1.bf16.msra.mxu0 0
        %1523 = vmatprep.subr.bf16.mxu0 0
        %1524 = vmatpush1.bf16.msra.mxu0 0
        %1525 = vmatprep.subr.bf16.mxu0 0
        %1526 = vmatpush1.bf16.msra.mxu0 0
        %1527 = vmatprep.subr.bf16.mxu0 0
        %1528 = vmatpush1.bf16.msra.mxu0 0
        %1529 = vmatprep.subr.bf16.mxu0 0
        %1530 = vmatpush1.bf16.msra.mxu0 0
        %1531 = vmatprep.subr.bf16.mxu0 0
        %1532 = vmatpush1.bf16.msra.mxu0 0
        %1533 = vmatprep.mubr.bf16.mxu0 0
        %1534 = vmatmul.mubr.bf16.gmra.mrb[0].mxu0 %v712
        %v1535 = vpop.f32.mrb[0].mxu0
        %v1536 = vadd.f32 %v1351, %v1535
        %v1537 = vpop.f32.mrb[0].mxu0
        %v1538 = vpop.f32.mrb[0].mxu0
        %v1539 = vadd.f32 %v1354, %v1538
        %v1540 = vpop.f32.mrb[0].mxu0
        %1541 = vmatprep.mubr.bf16.mxu0 0
        %1542 = vmatmul.mubr.bf16.gmra.mrb[0].mxu0 %v715
        %v1543 = vpop.f32.mrb[0].mxu0
        %v1544 = vadd.f32 %v1359, %v1543
        %v1545 = vpop.f32.mrb[0].mxu0
        %v1546 = vpop.f32.mrb[0].mxu0
        %v1547 = vadd.f32 %v1362, %v1546
        %v1548 = vpop.f32.mrb[0].mxu0
        %1549 = vmatprep.mubr.bf16.mxu0 0
        %1550 = vmatmul.mubr.bf16.gmra.mrb[0].mxu0 %v718
        %v1551 = vpop.f32.mrb[0].mxu0
        %v1552 = vadd.f32 %v1367, %v1551
        %v1553 = vpop.f32.mrb[0].mxu0
        %v1554 = vpop.f32.mrb[0].mxu0
        %v1555 = vadd.f32 %v1370, %v1554
        %v1556 = vpop.f32.mrb[0].mxu0
        %1557 = vmatprep.mubr.bf16.mxu0 0
        %1558 = vmatmul.mubr.bf16.gmra.mrb[0].mxu0 %v721
        %v1559 = vpop.f32.mrb[0].mxu0
        %v1560 = vadd.f32 %v1375, %v1559
        %v1561 = vpop.f32.mrb[0].mxu0
        %v1562 = vpop.f32.mrb[0].mxu0
        %v1563 = vadd.f32 %v1378, %v1562
        %v1564 = vpop.f32.mrb[0].mxu0
        %1565 = vmatprep.mubr.bf16.mxu0 0
        %1566 = vmatmul.mubr.bf16.gmra.mrb[0].mxu0 %v724
        %v1567 = vpop.f32.mrb[0].mxu0
        %v1568 = vadd.f32 %v1383, %v1567
        %v1569 = vpop.f32.mrb[0].mxu0
        %v1570 = vpop.f32.mrb[0].mxu0
        %v1571 = vadd.f32 %v1386, %v1570
        %v1572 = vpop.f32.mrb[0].mxu0
        %1573 = vmatprep.mubr.bf16.mxu0 0
        %1574 = vmatmul.mubr.bf16.gmra.mrb[0].mxu0 %v727
        %v1575 = vpop.f32.mrb[0].mxu0
        %v1576 = vadd.f32 %v1391, %v1575
        %v1577 = vpop.f32.mrb[0].mxu0
        %v1578 = vpop.f32.mrb[0].mxu0
        %v1579 = vadd.f32 %v1394, %v1578
        %v1580 = vpop.f32.mrb[0].mxu0
        %1581 = vmatprep.mubr.bf16.mxu0 0
        %1582 = vmatmul.mubr.bf16.gmra.mrb[0].mxu0 %v730
        %v1583 = vpop.f32.mrb[0].mxu0
        %v1584 = vadd.f32 %v1399, %v1583
        %v1585 = vpop.f32.mrb[0].mxu0
        %v1586 = vpop.f32.mrb[0].mxu0
        %v1587 = vadd.f32 %v1402, %v1586
        %v1588 = vpop.f32.mrb[0].mxu0
        %1589 = vmatprep.mubr.bf16.mxu0 0
        %1590 = vmatmul.mubr.bf16.gmra.mrb[0].mxu0 %v733
        %v1591 = vpop.f32.mrb[0].mxu0
        %v1592 = vadd.f32 %v1407, %v1591
        %v1593 = vpop.f32.mrb[0].mxu0
        %v1594 = vpop.f32.mrb[0].mxu0
        %v1595 = vadd.f32 %v1410, %v1594
        %v1596 = vpop.f32.mrb[0].mxu0
        %1597 = vmatprep.mubr.bf16.mxu0 0
        %1598 = vmatmul.mubr.bf16.gmra.mrb[0].mxu0 %v736
        %v1599 = vpop.f32.mrb[0].mxu0
        %v1600 = vadd.f32 %v1415, %v1599
        %v1601 = vpop.f32.mrb[0].mxu0
        %v1602 = vpop.f32.mrb[0].mxu0
        %v1603 = vadd.f32 %v1418, %v1602
        %v1604 = vpop.f32.mrb[0].mxu0
        %1605 = vmatprep.mubr.bf16.mxu0 0
        %1606 = vmatmul.mubr.bf16.gmra.mrb[0].mxu0 %v739
        %v1607 = vpop.f32.mrb[0].mxu0
        %v1608 = vadd.f32 %v1423, %v1607
        %v1609 = vpop.f32.mrb[0].mxu0
        %v1610 = vpop.f32.mrb[0].mxu0
        %v1611 = vadd.f32 %v1426, %v1610
        %v1612 = vpop.f32.mrb[0].mxu0
        %1613 = vmatprep.mubr.bf16.mxu0 0
        %1614 = vmatmul.mubr.bf16.gmra.mrb[0].mxu0 %v742
        %v1615 = vpop.f32.mrb[0].mxu0
        %v1616 = vadd.f32 %v1431, %v1615
        %v1617 = vpop.f32.mrb[0].mxu0
        %v1618 = vpop.f32.mrb[0].mxu0
        %v1619 = vadd.f32 %v1434, %v1618
        %v1620 = vpop.f32.mrb[0].mxu0
        %1621 = vmatprep.mubr.bf16.mxu0 0
        %1622 = vmatmul.mubr.bf16.gmra.mrb[0].mxu0 %v745
        %v1623 = vpop.f32.mrb[0].mxu0
        %v1624 = vadd.f32 %v1439, %v1623
        %v1625 = vpop.f32.mrb[0].mxu0
        %v1626 = vpop.f32.mrb[0].mxu0
        %v1627 = vadd.f32 %v1442, %v1626
        %v1628 = vpop.f32.mrb[0].mxu0
        %1629 = vmatprep.mubr.bf16.mxu0 0
        %1630 = vmatmul.mubr.bf16.gmra.mrb[0].mxu0 %v748
        %v1631 = vpop.f32.mrb[0].mxu0
        %v1632 = vadd.f32 %v1447, %v1631
        %v1633 = vpop.f32.mrb[0].mxu0
        %v1634 = vpop.f32.mrb[0].mxu0
        %v1635 = vadd.f32 %v1450, %v1634
        %v1636 = vpop.f32.mrb[0].mxu0
        %1637 = vmatprep.mubr.bf16.mxu0 0
        %1638 = vmatmul.mubr.bf16.gmra.mrb[0].mxu0 %v751
        %v1639 = vpop.f32.mrb[0].mxu0
        %v1640 = vadd.f32 %v1455, %v1639
        %v1641 = vpop.f32.mrb[0].mxu0
        %v1642 = vpop.f32.mrb[0].mxu0
        %v1643 = vadd.f32 %v1458, %v1642
        %v1644 = vpop.f32.mrb[0].mxu0
        %1645 = vmatprep.mubr.bf16.mxu0 0
        %1646 = vmatmul.mubr.bf16.gmra.mrb[0].mxu0 %v754
        %v1647 = vpop.f32.mrb[0].mxu0
        %v1648 = vadd.f32 %v1463, %v1647
        %v1649 = vpop.f32.mrb[0].mxu0
        %v1650 = vpop.f32.mrb[0].mxu0
        %v1651 = vadd.f32 %v1466, %v1650
        %v1652 = vpop.f32.mrb[0].mxu0
        %1653 = vmatprep.mubr.bf16.mxu0 0
        %1654 = vmatmul.mubr.bf16.gmra.mrb[0].mxu0 %v757
        %v1655 = vpop.f32.mrb[0].mxu0
        %v1656 = vadd.f32 %v1471, %v1655
        %v1657 = vpop.f32.mrb[0].mxu0
        %v1658 = vpop.f32.mrb[0].mxu0
        %v1659 = vadd.f32 %v1474, %v1658
        %v1660 = vpop.f32.mrb[0].mxu0
        %1661 = vdwg.mxu0
        %s1662 = scalar_lea.vmem [#allocation2], 224
        %v1663 = vld [vmem:[%s1662] sm:$0xf]
        %v1664 = vld [vmem:[%s1662 + $0x4] sm:$0xf]
        %v1665 = vld [vmem:[%s1662 + $0x8] sm:$0xf]
        %v1666 = vld [vmem:[%s1662 + $0xc] sm:$0xf]
        %v1667 = vld [vmem:[%s1662 + $0x10] sm:$0xf]
        %v1668 = vld [vmem:[%s1662 + $0x14] sm:$0xf]
        %v1669 = vld [vmem:[%s1662 + $0x18] sm:$0xf]
        %v1670 = vld [vmem:[%s1662 + $0x1c] sm:$0xf]
        %v1679 = vunpack.c.l.b16 %v1663
        %v1680 = vunpack.c.l.b16 %v1664
        %v1681 = vunpack.c.l.b16 %v1665
        %v1682 = vunpack.c.l.b16 %v1666
        %v1683 = vunpack.c.l.b16 %v1667
        %v1684 = vunpack.c.l.b16 %v1668
        %v1685 = vunpack.c.l.b16 %v1669
        %v1686 = vunpack.c.l.b16 %v1670
        %v1687 = vpack.c.b16 %v1680, %v1679
        %v1688 = vpack.c.b16 %v1682, %v1681
        %v1689 = vpack.c.b16 %v1684, %v1683
        %v1690 = vpack.c.b16 %v1686, %v1685
        %1695 = vmatprep.subr.bf16.mxu0 0
        %1696 = vmatpush1.bf16.msra.mxu0 %v1687
        %1697 = vmatprep.subr.bf16.mxu0 0
        %1698 = vmatpush1.bf16.msra.mxu0 %v1688
        %1699 = vmatprep.subr.bf16.mxu0 0
        %1700 = vmatpush1.bf16.msra.mxu0 %v1689
        %1701 = vmatprep.subr.bf16.mxu0 0
        %1702 = vmatpush1.bf16.msra.mxu0 %v1690
        %1703 = vmatprep.subr.bf16.mxu0 0
        %1704 = vmatpush1.bf16.msra.mxu0 0
        %1705 = vmatprep.subr.bf16.mxu0 0
        %1706 = vmatpush1.bf16.msra.mxu0 0
        %1707 = vmatprep.subr.bf16.mxu0 0
        %1708 = vmatpush1.bf16.msra.mxu0 0
        %1709 = vmatprep.subr.bf16.mxu0 0
        %1710 = vmatpush1.bf16.msra.mxu0 0
        %1711 = vmatprep.subr.bf16.mxu0 0
        %1712 = vmatpush1.bf16.msra.mxu0 0
        %1713 = vmatprep.subr.bf16.mxu0 0
        %1714 = vmatpush1.bf16.msra.mxu0 0
        %1715 = vmatprep.subr.bf16.mxu0 0
        %1716 = vmatpush1.bf16.msra.mxu0 0
        %1717 = vmatprep.subr.bf16.mxu0 0
        %1718 = vmatpush1.bf16.msra.mxu0 0
        %1719 = vmatprep.subr.bf16.mxu0 0
        %1720 = vmatpush1.bf16.msra.mxu0 0
        %1721 = vmatprep.subr.bf16.mxu0 0
        %1722 = vmatpush1.bf16.msra.mxu0 0
        %1723 = vmatprep.subr.bf16.mxu0 0
        %1724 = vmatpush1.bf16.msra.mxu0 0
        %1725 = vmatprep.subr.bf16.mxu0 0
        %1726 = vmatpush1.bf16.msra.mxu0 0
        %1727 = vmatprep.mubr.bf16.mxu0 0
        %1728 = vmatmul.mubr.bf16.gmra.mrb[0].mxu0 %v1034
        %v1729 = vpop.f32.mrb[0].mxu0
        %v1730 = vadd.f32 0.0, %v1729
        %v1731 = vpop.f32.mrb[0].mxu0
        %v1732 = vpop.f32.mrb[0].mxu0
        %v1733 = vadd.f32 0.0, %v1732
        %v1734 = vpop.f32.mrb[0].mxu0
        %1735 = vmatprep.mubr.bf16.mxu0 0
        %1736 = vmatmul.mubr.bf16.gmra.mrb[0].mxu0 %v1037
        %v1737 = vpop.f32.mrb[0].mxu0
        %v1738 = vadd.f32 0.0, %v1737
        %v1739 = vpop.f32.mrb[0].mxu0
        %v1740 = vpop.f32.mrb[0].mxu0
        %v1741 = vadd.f32 0.0, %v1740
        %v1742 = vpop.f32.mrb[0].mxu0
        %1743 = vmatprep.mubr.bf16.mxu0 0
        %1744 = vmatmul.mubr.bf16.gmra.mrb[0].mxu0 %v1040
        %v1745 = vpop.f32.mrb[0].mxu0
        %v1746 = vadd.f32 0.0, %v1745
        %v1747 = vpop.f32.mrb[0].mxu0
        %v1748 = vpop.f32.mrb[0].mxu0
        %v1749 = vadd.f32 0.0, %v1748
        %v1750 = vpop.f32.mrb[0].mxu0
        %1751 = vmatprep.mubr.bf16.mxu0 0
        %1752 = vmatmul.mubr.bf16.gmra.mrb[0].mxu0 %v1043
        %v1753 = vpop.f32.mrb[0].mxu0
        %v1754 = vadd.f32 0.0, %v1753
        %v1755 = vpop.f32.mrb[0].mxu0
        %v1756 = vpop.f32.mrb[0].mxu0
        %v1757 = vadd.f32 0.0, %v1756
        %v1758 = vpop.f32.mrb[0].mxu0
        %1759 = vmatprep.mubr.bf16.mxu0 0
        %1760 = vmatmul.mubr.bf16.gmra.mrb[0].mxu0 %v1046
        %v1761 = vpop.f32.mrb[0].mxu0
        %v1762 = vadd.f32 0.0, %v1761
        %v1763 = vpop.f32.mrb[0].mxu0
        %v1764 = vpop.f32.mrb[0].mxu0
        %v1765 = vadd.f32 0.0, %v1764
        %v1766 = vpop.f32.mrb[0].mxu0
        %1767 = vmatprep.mubr.bf16.mxu0 0
        %1768 = vmatmul.mubr.bf16.gmra.mrb[0].mxu0 %v1049
        %v1769 = vpop.f32.mrb[0].mxu0
        %v1770 = vadd.f32 0.0, %v1769
        %v1771 = vpop.f32.mrb[0].mxu0
        %v1772 = vpop.f32.mrb[0].mxu0
        %v1773 = vadd.f32 0.0, %v1772
        %v1774 = vpop.f32.mrb[0].mxu0
        %1775 = vmatprep.mubr.bf16.mxu0 0
        %1776 = vmatmul.mubr.bf16.gmra.mrb[0].mxu0 %v1052
        %v1777 = vpop.f32.mrb[0].mxu0
        %v1778 = vadd.f32 0.0, %v1777
        %v1779 = vpop.f32.mrb[0].mxu0
        %v1780 = vpop.f32.mrb[0].mxu0
        %v1781 = vadd.f32 0.0, %v1780
        %v1782 = vpop.f32.mrb[0].mxu0
        %1783 = vmatprep.mubr.bf16.mxu0 0
        %1784 = vmatmul.mubr.bf16.gmra.mrb[0].mxu0 %v1055
        %v1785 = vpop.f32.mrb[0].mxu0
        %v1786 = vadd.f32 0.0, %v1785
        %v1787 = vpop.f32.mrb[0].mxu0
        %v1788 = vpop.f32.mrb[0].mxu0
        %v1789 = vadd.f32 0.0, %v1788
        %v1790 = vpop.f32.mrb[0].mxu0
        %1791 = vmatprep.mubr.bf16.mxu0 0
        %1792 = vmatmul.mubr.bf16.gmra.mrb[0].mxu0 %v1058
        %v1793 = vpop.f32.mrb[0].mxu0
        %v1794 = vadd.f32 0.0, %v1793
        %v1795 = vpop.f32.mrb[0].mxu0
        %v1796 = vpop.f32.mrb[0].mxu0
        %v1797 = vadd.f32 0.0, %v1796
        %v1798 = vpop.f32.mrb[0].mxu0
        %1799 = vmatprep.mubr.bf16.mxu0 0
        %1800 = vmatmul.mubr.bf16.gmra.mrb[0].mxu0 %v1061
        %v1801 = vpop.f32.mrb[0].mxu0
        %v1802 = vadd.f32 0.0, %v1801
        %v1803 = vpop.f32.mrb[0].mxu0
        %v1804 = vpop.f32.mrb[0].mxu0
        %v1805 = vadd.f32 0.0, %v1804
        %v1806 = vpop.f32.mrb[0].mxu0
        %1807 = vmatprep.mubr.bf16.mxu0 0
        %1808 = vmatmul.mubr.bf16.gmra.mrb[0].mxu0 %v1064
        %v1809 = vpop.f32.mrb[0].mxu0
        %v1810 = vadd.f32 0.0, %v1809
        %v1811 = vpop.f32.mrb[0].mxu0
        %v1812 = vpop.f32.mrb[0].mxu0
        %v1813 = vadd.f32 0.0, %v1812
        %v1814 = vpop.f32.mrb[0].mxu0
        %1815 = vmatprep.mubr.bf16.mxu0 0
        %1816 = vmatmul.mubr.bf16.gmra.mrb[0].mxu0 %v1067
        %v1817 = vpop.f32.mrb[0].mxu0
        %v1818 = vadd.f32 0.0, %v1817
        %v1819 = vpop.f32.mrb[0].mxu0
        %v1820 = vpop.f32.mrb[0].mxu0
        %v1821 = vadd.f32 0.0, %v1820
        %v1822 = vpop.f32.mrb[0].mxu0
        %1823 = vmatprep.mubr.bf16.mxu0 0
        %1824 = vmatmul.mubr.bf16.gmra.mrb[0].mxu0 %v1070
        %v1825 = vpop.f32.mrb[0].mxu0
        %v1826 = vadd.f32 0.0, %v1825
        %v1827 = vpop.f32.mrb[0].mxu0
        %v1828 = vpop.f32.mrb[0].mxu0
        %v1829 = vadd.f32 0.0, %v1828
        %v1830 = vpop.f32.mrb[0].mxu0
        %1831 = vmatprep.mubr.bf16.mxu0 0
        %1832 = vmatmul.mubr.bf16.gmra.mrb[0].mxu0 %v1073
        %v1833 = vpop.f32.mrb[0].mxu0
        %v1834 = vadd.f32 0.0, %v1833
        %v1835 = vpop.f32.mrb[0].mxu0
        %v1836 = vpop.f32.mrb[0].mxu0
        %v1837 = vadd.f32 0.0, %v1836
        %v1838 = vpop.f32.mrb[0].mxu0
        %1839 = vmatprep.mubr.bf16.mxu0 0
        %1840 = vmatmul.mubr.bf16.gmra.mrb[0].mxu0 %v1076
        %v1841 = vpop.f32.mrb[0].mxu0
        %v1842 = vadd.f32 0.0, %v1841
        %v1843 = vpop.f32.mrb[0].mxu0
        %v1844 = vpop.f32.mrb[0].mxu0
        %v1845 = vadd.f32 0.0, %v1844
        %v1846 = vpop.f32.mrb[0].mxu0
        %1847 = vmatprep.mubr.bf16.mxu0 0
        %1848 = vmatmul.mubr.bf16.gmra.mrb[0].mxu0 %v1079
        %v1849 = vpop.f32.mrb[0].mxu0
        %v1850 = vadd.f32 0.0, %v1849
        %v1851 = vpop.f32.mrb[0].mxu0
        %v1852 = vpop.f32.mrb[0].mxu0
        %v1853 = vadd.f32 0.0, %v1852
        %v1854 = vpop.f32.mrb[0].mxu0
        %1855 = vdwg.mxu0
        %v1856 = vadd.f32 %v1536, %v1730
        %v1857 = vadd.f32 %v1539, %v1733
        %v1858 = vadd.f32 %v1544, %v1738
        %v1859 = vadd.f32 %v1547, %v1741
        %v1860 = vadd.f32 %v1552, %v1746
        %v1861 = vadd.f32 %v1555, %v1749
        %v1862 = vadd.f32 %v1560, %v1754
        %v1863 = vadd.f32 %v1563, %v1757
        %v1864 = vadd.f32 %v1568, %v1762
        %v1865 = vadd.f32 %v1571, %v1765
        %v1866 = vadd.f32 %v1576, %v1770
        %v1867 = vadd.f32 %v1579, %v1773
        %v1868 = vadd.f32 %v1584, %v1778
        %v1869 = vadd.f32 %v1587, %v1781
        %v1870 = vadd.f32 %v1592, %v1786
        %v1871 = vadd.f32 %v1595, %v1789
        %v1872 = vadd.f32 %v1600, %v1794
        %v1873 = vadd.f32 %v1603, %v1797
        %v1874 = vadd.f32 %v1608, %v1802
        %v1875 = vadd.f32 %v1611, %v1805
        %v1876 = vadd.f32 %v1616, %v1810
        %v1877 = vadd.f32 %v1619, %v1813
        %v1878 = vadd.f32 %v1624, %v1818
        %v1879 = vadd.f32 %v1627, %v1821
        %v1880 = vadd.f32 %v1632, %v1826
        %v1881 = vadd.f32 %v1635, %v1829
        %v1882 = vadd.f32 %v1640, %v1834
        %v1883 = vadd.f32 %v1643, %v1837
        %v1884 = vadd.f32 %v1648, %v1842
        %v1885 = vadd.f32 %v1651, %v1845
        %v1886 = vadd.f32 %v1656, %v1850
        %v1887 = vadd.f32 %v1659, %v1853
        %v1888 = vrot.slane %v1856, 1
        %v1889 = vrot.slane %v1857, 1
        %v1890 = vrot.slane %v1858, 1
        %v1891 = vrot.slane %v1859, 1
        %v1892 = vrot.slane %v1860, 1
        %v1893 = vrot.slane %v1861, 1
        %v1894 = vrot.slane %v1862, 1
        %v1895 = vrot.slane %v1863, 1
        %v1896 = vrot.slane %v1864, 1
        %v1897 = vrot.slane %v1865, 1
        %v1898 = vrot.slane %v1866, 1
        %v1899 = vrot.slane %v1867, 1
        %v1900 = vrot.slane %v1868, 1
        %v1901 = vrot.slane %v1869, 1
        %v1902 = vrot.slane %v1870, 1
        %v1903 = vrot.slane %v1871, 1
        %v1904 = vrot.slane %v1872, 1
        %v1905 = vrot.slane %v1873, 1
        %v1906 = vrot.slane %v1874, 1
        %v1907 = vrot.slane %v1875, 1
        %v1908 = vrot.slane %v1876, 1
        %v1909 = vrot.slane %v1877, 1
        %v1910 = vrot.slane %v1878, 1
        %v1911 = vrot.slane %v1879, 1
        %v1912 = vrot.slane %v1880, 1
        %v1913 = vrot.slane %v1881, 1
        %v1914 = vrot.slane %v1882, 1
        %v1915 = vrot.slane %v1883, 1
        %v1916 = vrot.slane %v1884, 1
        %v1917 = vrot.slane %v1885, 1
        %v1918 = vrot.slane %v1886, 1
        %v1919 = vrot.slane %v1887, 1
        %v1920 = vlaneseq
        %v1921 = vshrl.u32 %v1920, 7
        %vm1922 = vcmp.lt.s32.totalorder %v1921, 7
        %v1923 = vsel %vm1922, %v1918, %v1919
        %v1924 = vsel %vm1922, %v1917, %v1918
        %v1925 = vsel %vm1922, %v1916, %v1917
        %v1926 = vsel %vm1922, %v1915, %v1916
        %v1927 = vsel %vm1922, %v1914, %v1915
        %v1928 = vsel %vm1922, %v1913, %v1914
        %v1929 = vsel %vm1922, %v1912, %v1913
        %v1930 = vsel %vm1922, %v1911, %v1912
        %v1931 = vsel %vm1922, %v1910, %v1911
        %v1932 = vsel %vm1922, %v1909, %v1910
        %v1933 = vsel %vm1922, %v1908, %v1909
        %v1934 = vsel %vm1922, %v1907, %v1908
        %v1935 = vsel %vm1922, %v1906, %v1907
        %v1936 = vsel %vm1922, %v1905, %v1906
        %v1937 = vsel %vm1922, %v1904, %v1905
        %v1938 = vsel %vm1922, %v1903, %v1904
        %v1939 = vsel %vm1922, %v1902, %v1903
        %v1940 = vsel %vm1922, %v1901, %v1902
        %v1941 = vsel %vm1922, %v1900, %v1901
        %v1942 = vsel %vm1922, %v1899, %v1900
        %v1943 = vsel %vm1922, %v1898, %v1899
        %v1944 = vsel %vm1922, %v1897, %v1898
        %v1945 = vsel %vm1922, %v1896, %v1897
        %v1946 = vsel %vm1922, %v1895, %v1896
        %v1947 = vsel %vm1922, %v1894, %v1895
        %v1948 = vsel %vm1922, %v1893, %v1894
        %v1949 = vsel %vm1922, %v1892, %v1893
        %v1950 = vsel %vm1922, %v1891, %v1892
        %v1951 = vsel %vm1922, %v1890, %v1891
        %v1952 = vsel %vm1922, %v1889, %v1890
        %v1953 = vsel %vm1922, %v1888, %v1889
        %v1954 = vsel %vm1922, %v1919, %v1888
        %v1955 = vadd.f32 %v1242, %v1953
        %v1956 = vadd.f32 %v1243, %v1952
        %v1957 = vadd.f32 %v1244, %v1951
        %v1958 = vadd.f32 %v1245, %v1950
        %v1959 = vadd.f32 %v1246, %v1949
        %v1960 = vadd.f32 %v1247, %v1948
        %v1961 = vadd.f32 %v1248, %v1947
        %v1962 = vadd.f32 %v1249, %v1946
        %v1963 = vadd.f32 %v1250, %v1945
        %v1964 = vadd.f32 %v1251, %v1944
        %v1965 = vadd.f32 %v1252, %v1943
        %v1966 = vadd.f32 %v1253, %v1942
        %v1967 = vadd.f32 %v1254, %v1941
        %v1968 = vadd.f32 %v1255, %v1940
        %v1969 = vadd.f32 %v1256, %v1939
        %v1970 = vadd.f32 %v1257, %v1938
        %v1971 = vadd.f32 %v1258, %v1937
        %v1972 = vadd.f32 %v1259, %v1936
        %v1973 = vadd.f32 %v1260, %v1935
        %v1974 = vadd.f32 %v1261, %v1934
        %v1975 = vadd.f32 %v1262, %v1933
        %v1976 = vadd.f32 %v1263, %v1932
        %v1977 = vadd.f32 %v1264, %v1931
        %v1978 = vadd.f32 %v1265, %v1930
        %v1979 = vadd.f32 %v1266, %v1929
        %v1980 = vadd.f32 %v1267, %v1928
        %v1981 = vadd.f32 %v1268, %v1927
        %v1982 = vadd.f32 %v1269, %v1926
        %v1983 = vadd.f32 %v1270, %v1925
        %v1984 = vadd.f32 %v1271, %v1924
        %v1985 = vadd.f32 %v1272, %v1923
        %v1986 = vadd.f32 %v1273, %v1954
        %s1987 = scalar_lea.vmem [#allocation2], 64
        %v1988 = vld [vmem:[%s1987] sm:$0xf]
        %v1989 = vld [vmem:[%s1987 + $0x4] sm:$0xf]
        %v1990 = vld [vmem:[%s1987 + $0x8] sm:$0xf]
        %v1991 = vld [vmem:[%s1987 + $0xc] sm:$0xf]
        %v1992 = vld [vmem:[%s1987 + $0x10] sm:$0xf]
        %v1993 = vld [vmem:[%s1987 + $0x14] sm:$0xf]
        %v1994 = vld [vmem:[%s1987 + $0x18] sm:$0xf]
        %v1995 = vld [vmem:[%s1987 + $0x1c] sm:$0xf]
        %s1996 = scalar_lea.vmem [#allocation2], 160
        %v1997 = vld [vmem:[%s1996] sm:$0xf]
        %v1998 = vld [vmem:[%s1996 + $0x4] sm:$0xf]
        %v1999 = vld [vmem:[%s1996 + $0x8] sm:$0xf]
        %v2000 = vld [vmem:[%s1996 + $0xc] sm:$0xf]
        %v2001 = vld [vmem:[%s1996 + $0x10] sm:$0xf]
        %v2002 = vld [vmem:[%s1996 + $0x14] sm:$0xf]
        %v2003 = vld [vmem:[%s1996 + $0x18] sm:$0xf]
        %v2004 = vld [vmem:[%s1996 + $0x1c] sm:$0xf]
        %v2013 = vunpack.c.l.b16 %v1997
        %v2014 = vunpack.c.l.b16 %v1998
        %v2015 = vunpack.c.l.b16 %v1999
        %v2016 = vunpack.c.l.b16 %v2000
        %v2017 = vunpack.c.l.b16 %v2001
        %v2018 = vunpack.c.l.b16 %v2002
        %v2019 = vunpack.c.l.b16 %v2003
        %v2020 = vunpack.c.l.b16 %v2004
        %v2021 = vpack.c.b16 %v2014, %v2013
        %v2022 = vpack.c.b16 %v2016, %v2015
        %v2023 = vpack.c.b16 %v2018, %v2017
        %v2024 = vpack.c.b16 %v2020, %v2019
        %2029 = vmatprep.subr.bf16.mxu0 0
        %2030 = vmatpush1.bf16.msra.mxu0 %v2021
        %2031 = vmatprep.subr.bf16.mxu0 0
        %2032 = vmatpush1.bf16.msra.mxu0 %v2022
        %2033 = vmatprep.subr.bf16.mxu0 0
        %2034 = vmatpush1.bf16.msra.mxu0 %v2023
        %2035 = vmatprep.subr.bf16.mxu0 0
        %2036 = vmatpush1.bf16.msra.mxu0 %v2024
        %2037 = vmatprep.subr.bf16.mxu0 0
        %2038 = vmatpush1.bf16.msra.mxu0 0
        %2039 = vmatprep.subr.bf16.mxu0 0
        %2040 = vmatpush1.bf16.msra.mxu0 0
        %2041 = vmatprep.subr.bf16.mxu0 0
        %2042 = vmatpush1.bf16.msra.mxu0 0
        %2043 = vmatprep.subr.bf16.mxu0 0
        %2044 = vmatpush1.bf16.msra.mxu0 0
        %2045 = vmatprep.subr.bf16.mxu0 0
        %2046 = vmatpush1.bf16.msra.mxu0 0
        %2047 = vmatprep.subr.bf16.mxu0 0
        %2048 = vmatpush1.bf16.msra.mxu0 0
        %2049 = vmatprep.subr.bf16.mxu0 0
        %2050 = vmatpush1.bf16.msra.mxu0 0
        %2051 = vmatprep.subr.bf16.mxu0 0
        %2052 = vmatpush1.bf16.msra.mxu0 0
        %2053 = vmatprep.subr.bf16.mxu0 0
        %2054 = vmatpush1.bf16.msra.mxu0 0
        %2055 = vmatprep.subr.bf16.mxu0 0
        %2056 = vmatpush1.bf16.msra.mxu0 0
        %2057 = vmatprep.subr.bf16.mxu0 0
        %2058 = vmatpush1.bf16.msra.mxu0 0
        %2059 = vmatprep.subr.bf16.mxu0 0
        %2060 = vmatpush1.bf16.msra.mxu0 0
        %2061 = vmatprep.mubr.bf16.mxu0 0
        %2062 = vmatmul.mubr.bf16.gmra.mrb[0].mxu0 %v399
        %v2063 = vpop.f32.mrb[0].mxu0
        %v2064 = vadd.f32 0.0, %v2063
        %v2065 = vpop.f32.mrb[0].mxu0
        %v2066 = vpop.f32.mrb[0].mxu0
        %v2067 = vadd.f32 0.0, %v2066
        %v2068 = vpop.f32.mrb[0].mxu0
        %2069 = vmatprep.mubr.bf16.mxu0 0
        %2070 = vmatmul.mubr.bf16.gmra.mrb[0].mxu0 %v402
        %v2071 = vpop.f32.mrb[0].mxu0
        %v2072 = vadd.f32 0.0, %v2071
        %v2073 = vpop.f32.mrb[0].mxu0
        %v2074 = vpop.f32.mrb[0].mxu0
        %v2075 = vadd.f32 0.0, %v2074
        %v2076 = vpop.f32.mrb[0].mxu0
        %2077 = vmatprep.mubr.bf16.mxu0 0
        %2078 = vmatmul.mubr.bf16.gmra.mrb[0].mxu0 %v405
        %v2079 = vpop.f32.mrb[0].mxu0
        %v2080 = vadd.f32 0.0, %v2079
        %v2081 = vpop.f32.mrb[0].mxu0
        %v2082 = vpop.f32.mrb[0].mxu0
        %v2083 = vadd.f32 0.0, %v2082
        %v2084 = vpop.f32.mrb[0].mxu0
        %2085 = vmatprep.mubr.bf16.mxu0 0
        %2086 = vmatmul.mubr.bf16.gmra.mrb[0].mxu0 %v408
        %v2087 = vpop.f32.mrb[0].mxu0
        %v2088 = vadd.f32 0.0, %v2087
        %v2089 = vpop.f32.mrb[0].mxu0
        %v2090 = vpop.f32.mrb[0].mxu0
        %v2091 = vadd.f32 0.0, %v2090
        %v2092 = vpop.f32.mrb[0].mxu0
        %2093 = vmatprep.mubr.bf16.mxu0 0
        %2094 = vmatmul.mubr.bf16.gmra.mrb[0].mxu0 %v411
        %v2095 = vpop.f32.mrb[0].mxu0
        %v2096 = vadd.f32 0.0, %v2095
        %v2097 = vpop.f32.mrb[0].mxu0
        %v2098 = vpop.f32.mrb[0].mxu0
        %v2099 = vadd.f32 0.0, %v2098
        %v2100 = vpop.f32.mrb[0].mxu0
        %2101 = vmatprep.mubr.bf16.mxu0 0
        %2102 = vmatmul.mubr.bf16.gmra.mrb[0].mxu0 %v414
        %v2103 = vpop.f32.mrb[0].mxu0
        %v2104 = vadd.f32 0.0, %v2103
        %v2105 = vpop.f32.mrb[0].mxu0
        %v2106 = vpop.f32.mrb[0].mxu0
        %v2107 = vadd.f32 0.0, %v2106
        %v2108 = vpop.f32.mrb[0].mxu0
        %2109 = vmatprep.mubr.bf16.mxu0 0
        %2110 = vmatmul.mubr.bf16.gmra.mrb[0].mxu0 %v417
        %v2111 = vpop.f32.mrb[0].mxu0
        %v2112 = vadd.f32 0.0, %v2111
        %v2113 = vpop.f32.mrb[0].mxu0
        %v2114 = vpop.f32.mrb[0].mxu0
        %v2115 = vadd.f32 0.0, %v2114
        %v2116 = vpop.f32.mrb[0].mxu0
        %2117 = vmatprep.mubr.bf16.mxu0 0
        %2118 = vmatmul.mubr.bf16.gmra.mrb[0].mxu0 %v420
        %v2119 = vpop.f32.mrb[0].mxu0
        %v2120 = vadd.f32 0.0, %v2119
        %v2121 = vpop.f32.mrb[0].mxu0
        %v2122 = vpop.f32.mrb[0].mxu0
        %v2123 = vadd.f32 0.0, %v2122
        %v2124 = vpop.f32.mrb[0].mxu0
        %2125 = vmatprep.mubr.bf16.mxu0 0
        %2126 = vmatmul.mubr.bf16.gmra.mrb[0].mxu0 %v423
        %v2127 = vpop.f32.mrb[0].mxu0
        %v2128 = vadd.f32 0.0, %v2127
        %v2129 = vpop.f32.mrb[0].mxu0
        %v2130 = vpop.f32.mrb[0].mxu0
        %v2131 = vadd.f32 0.0, %v2130
        %v2132 = vpop.f32.mrb[0].mxu0
        %2133 = vmatprep.mubr.bf16.mxu0 0
        %2134 = vmatmul.mubr.bf16.gmra.mrb[0].mxu0 %v426
        %v2135 = vpop.f32.mrb[0].mxu0
        %v2136 = vadd.f32 0.0, %v2135
        %v2137 = vpop.f32.mrb[0].mxu0
        %v2138 = vpop.f32.mrb[0].mxu0
        %v2139 = vadd.f32 0.0, %v2138
        %v2140 = vpop.f32.mrb[0].mxu0
        %2141 = vmatprep.mubr.bf16.mxu0 0
        %2142 = vmatmul.mubr.bf16.gmra.mrb[0].mxu0 %v429
        %v2143 = vpop.f32.mrb[0].mxu0
        %v2144 = vadd.f32 0.0, %v2143
        %v2145 = vpop.f32.mrb[0].mxu0
        %v2146 = vpop.f32.mrb[0].mxu0
        %v2147 = vadd.f32 0.0, %v2146
        %v2148 = vpop.f32.mrb[0].mxu0
        %2149 = vmatprep.mubr.bf16.mxu0 0
        %2150 = vmatmul.mubr.bf16.gmra.mrb[0].mxu0 %v432
        %v2151 = vpop.f32.mrb[0].mxu0
        %v2152 = vadd.f32 0.0, %v2151
        %v2153 = vpop.f32.mrb[0].mxu0
        %v2154 = vpop.f32.mrb[0].mxu0
        %v2155 = vadd.f32 0.0, %v2154
        %v2156 = vpop.f32.mrb[0].mxu0
        %2157 = vmatprep.mubr.bf16.mxu0 0
        %2158 = vmatmul.mubr.bf16.gmra.mrb[0].mxu0 %v435
        %v2159 = vpop.f32.mrb[0].mxu0
        %v2160 = vadd.f32 0.0, %v2159
        %v2161 = vpop.f32.mrb[0].mxu0
        %v2162 = vpop.f32.mrb[0].mxu0
        %v2163 = vadd.f32 0.0, %v2162
        %v2164 = vpop.f32.mrb[0].mxu0
        %2165 = vmatprep.mubr.bf16.mxu0 0
        %2166 = vmatmul.mubr.bf16.gmra.mrb[0].mxu0 %v438
        %v2167 = vpop.f32.mrb[0].mxu0
        %v2168 = vadd.f32 0.0, %v2167
        %v2169 = vpop.f32.mrb[0].mxu0
        %v2170 = vpop.f32.mrb[0].mxu0
        %v2171 = vadd.f32 0.0, %v2170
        %v2172 = vpop.f32.mrb[0].mxu0
        %2173 = vmatprep.mubr.bf16.mxu0 0
        %2174 = vmatmul.mubr.bf16.gmra.mrb[0].mxu0 %v441
        %v2175 = vpop.f32.mrb[0].mxu0
        %v2176 = vadd.f32 0.0, %v2175
        %v2177 = vpop.f32.mrb[0].mxu0
        %v2178 = vpop.f32.mrb[0].mxu0
        %v2179 = vadd.f32 0.0, %v2178
        %v2180 = vpop.f32.mrb[0].mxu0
        %2181 = vmatprep.mubr.bf16.mxu0 0
        %2182 = vmatmul.mubr.bf16.gmra.mrb[0].mxu0 %v444
        %v2183 = vpop.f32.mrb[0].mxu0
        %v2184 = vadd.f32 0.0, %v2183
        %v2185 = vpop.f32.mrb[0].mxu0
        %v2186 = vpop.f32.mrb[0].mxu0
        %v2187 = vadd.f32 0.0, %v2186
        %v2188 = vpop.f32.mrb[0].mxu0
        %2189 = vdwg.mxu0
        %v2198 = vunpack.c.l.b16 %v1988
        %v2199 = vunpack.c.l.b16 %v1989
        %v2200 = vunpack.c.l.b16 %v1990
        %v2201 = vunpack.c.l.b16 %v1991
        %v2202 = vunpack.c.l.b16 %v1992
        %v2203 = vunpack.c.l.b16 %v1993
        %v2204 = vunpack.c.l.b16 %v1994
        %v2205 = vunpack.c.l.b16 %v1995
        %v2206 = vpack.c.b16 %v2199, %v2198
        %v2207 = vpack.c.b16 %v2201, %v2200
        %v2208 = vpack.c.b16 %v2203, %v2202
        %v2209 = vpack.c.b16 %v2205, %v2204
        %2214 = vmatprep.subr.bf16.mxu0 0
        %2215 = vmatpush1.bf16.msra.mxu0 %v2206
        %2216 = vmatprep.subr.bf16.mxu0 0
        %2217 = vmatpush1.bf16.msra.mxu0 %v2207
        %2218 = vmatprep.subr.bf16.mxu0 0
        %2219 = vmatpush1.bf16.msra.mxu0 %v2208
        %2220 = vmatprep.subr.bf16.mxu0 0
        %2221 = vmatpush1.bf16.msra.mxu0 %v2209
        %2222 = vmatprep.subr.bf16.mxu0 0
        %2223 = vmatpush1.bf16.msra.mxu0 0
        %2224 = vmatprep.subr.bf16.mxu0 0
        %2225 = vmatpush1.bf16.msra.mxu0 0
        %2226 = vmatprep.subr.bf16.mxu0 0
        %2227 = vmatpush1.bf16.msra.mxu0 0
        %2228 = vmatprep.subr.bf16.mxu0 0
        %2229 = vmatpush1.bf16.msra.mxu0 0
        %2230 = vmatprep.subr.bf16.mxu0 0
        %2231 = vmatpush1.bf16.msra.mxu0 0
        %2232 = vmatprep.subr.bf16.mxu0 0
        %2233 = vmatpush1.bf16.msra.mxu0 0
        %2234 = vmatprep.subr.bf16.mxu0 0
        %2235 = vmatpush1.bf16.msra.mxu0 0
        %2236 = vmatprep.subr.bf16.mxu0 0
        %2237 = vmatpush1.bf16.msra.mxu0 0
        %2238 = vmatprep.subr.bf16.mxu0 0
        %2239 = vmatpush1.bf16.msra.mxu0 0
        %2240 = vmatprep.subr.bf16.mxu0 0
        %2241 = vmatpush1.bf16.msra.mxu0 0
        %2242 = vmatprep.subr.bf16.mxu0 0
        %2243 = vmatpush1.bf16.msra.mxu0 0
        %2244 = vmatprep.subr.bf16.mxu0 0
        %2245 = vmatpush1.bf16.msra.mxu0 0
        %2246 = vmatprep.mubr.bf16.mxu0 0
        %2247 = vmatmul.mubr.bf16.gmra.mrb[0].mxu0 %v712
        %v2248 = vpop.f32.mrb[0].mxu0
        %v2249 = vadd.f32 %v2064, %v2248
        %v2250 = vpop.f32.mrb[0].mxu0
        %v2251 = vpop.f32.mrb[0].mxu0
        %v2252 = vadd.f32 %v2067, %v2251
        %v2253 = vpop.f32.mrb[0].mxu0
        %2254 = vmatprep.mubr.bf16.mxu0 0
        %2255 = vmatmul.mubr.bf16.gmra.mrb[0].mxu0 %v715
        %v2256 = vpop.f32.mrb[0].mxu0
        %v2257 = vadd.f32 %v2072, %v2256
        %v2258 = vpop.f32.mrb[0].mxu0
        %v2259 = vpop.f32.mrb[0].mxu0
        %v2260 = vadd.f32 %v2075, %v2259
        %v2261 = vpop.f32.mrb[0].mxu0
        %2262 = vmatprep.mubr.bf16.mxu0 0
        %2263 = vmatmul.mubr.bf16.gmra.mrb[0].mxu0 %v718
        %v2264 = vpop.f32.mrb[0].mxu0
        %v2265 = vadd.f32 %v2080, %v2264
        %v2266 = vpop.f32.mrb[0].mxu0
        %v2267 = vpop.f32.mrb[0].mxu0
        %v2268 = vadd.f32 %v2083, %v2267
        %v2269 = vpop.f32.mrb[0].mxu0
        %2270 = vmatprep.mubr.bf16.mxu0 0
        %2271 = vmatmul.mubr.bf16.gmra.mrb[0].mxu0 %v721
        %v2272 = vpop.f32.mrb[0].mxu0
        %v2273 = vadd.f32 %v2088, %v2272
        %v2274 = vpop.f32.mrb[0].mxu0
        %v2275 = vpop.f32.mrb[0].mxu0
        %v2276 = vadd.f32 %v2091, %v2275
        %v2277 = vpop.f32.mrb[0].mxu0
        %2278 = vmatprep.mubr.bf16.mxu0 0
        %2279 = vmatmul.mubr.bf16.gmra.mrb[0].mxu0 %v724
        %v2280 = vpop.f32.mrb[0].mxu0
        %v2281 = vadd.f32 %v2096, %v2280
        %v2282 = vpop.f32.mrb[0].mxu0
        %v2283 = vpop.f32.mrb[0].mxu0
        %v2284 = vadd.f32 %v2099, %v2283
        %v2285 = vpop.f32.mrb[0].mxu0
        %2286 = vmatprep.mubr.bf16.mxu0 0
        %2287 = vmatmul.mubr.bf16.gmra.mrb[0].mxu0 %v727
        %v2288 = vpop.f32.mrb[0].mxu0
        %v2289 = vadd.f32 %v2104, %v2288
        %v2290 = vpop.f32.mrb[0].mxu0
        %v2291 = vpop.f32.mrb[0].mxu0
        %v2292 = vadd.f32 %v2107, %v2291
        %v2293 = vpop.f32.mrb[0].mxu0
        %2294 = vmatprep.mubr.bf16.mxu0 0
        %2295 = vmatmul.mubr.bf16.gmra.mrb[0].mxu0 %v730
        %v2296 = vpop.f32.mrb[0].mxu0
        %v2297 = vadd.f32 %v2112, %v2296
        %v2298 = vpop.f32.mrb[0].mxu0
        %v2299 = vpop.f32.mrb[0].mxu0
        %v2300 = vadd.f32 %v2115, %v2299
        %v2301 = vpop.f32.mrb[0].mxu0
        %2302 = vmatprep.mubr.bf16.mxu0 0
        %2303 = vmatmul.mubr.bf16.gmra.mrb[0].mxu0 %v733
        %v2304 = vpop.f32.mrb[0].mxu0
        %v2305 = vadd.f32 %v2120, %v2304
        %v2306 = vpop.f32.mrb[0].mxu0
        %v2307 = vpop.f32.mrb[0].mxu0
        %v2308 = vadd.f32 %v2123, %v2307
        %v2309 = vpop.f32.mrb[0].mxu0
        %2310 = vmatprep.mubr.bf16.mxu0 0
        %2311 = vmatmul.mubr.bf16.gmra.mrb[0].mxu0 %v736
        %v2312 = vpop.f32.mrb[0].mxu0
        %v2313 = vadd.f32 %v2128, %v2312
        %v2314 = vpop.f32.mrb[0].mxu0
        %v2315 = vpop.f32.mrb[0].mxu0
        %v2316 = vadd.f32 %v2131, %v2315
        %v2317 = vpop.f32.mrb[0].mxu0
        %2318 = vmatprep.mubr.bf16.mxu0 0
        %2319 = vmatmul.mubr.bf16.gmra.mrb[0].mxu0 %v739
        %v2320 = vpop.f32.mrb[0].mxu0
        %v2321 = vadd.f32 %v2136, %v2320
        %v2322 = vpop.f32.mrb[0].mxu0
        %v2323 = vpop.f32.mrb[0].mxu0
        %v2324 = vadd.f32 %v2139, %v2323
        %v2325 = vpop.f32.mrb[0].mxu0
        %2326 = vmatprep.mubr.bf16.mxu0 0
        %2327 = vmatmul.mubr.bf16.gmra.mrb[0].mxu0 %v742
        %v2328 = vpop.f32.mrb[0].mxu0
        %v2329 = vadd.f32 %v2144, %v2328
        %v2330 = vpop.f32.mrb[0].mxu0
        %v2331 = vpop.f32.mrb[0].mxu0
        %v2332 = vadd.f32 %v2147, %v2331
        %v2333 = vpop.f32.mrb[0].mxu0
        %2334 = vmatprep.mubr.bf16.mxu0 0
        %2335 = vmatmul.mubr.bf16.gmra.mrb[0].mxu0 %v745
        %v2336 = vpop.f32.mrb[0].mxu0
        %v2337 = vadd.f32 %v2152, %v2336
        %v2338 = vpop.f32.mrb[0].mxu0
        %v2339 = vpop.f32.mrb[0].mxu0
        %v2340 = vadd.f32 %v2155, %v2339
        %v2341 = vpop.f32.mrb[0].mxu0
        %2342 = vmatprep.mubr.bf16.mxu0 0
        %2343 = vmatmul.mubr.bf16.gmra.mrb[0].mxu0 %v748
        %v2344 = vpop.f32.mrb[0].mxu0
        %v2345 = vadd.f32 %v2160, %v2344
        %v2346 = vpop.f32.mrb[0].mxu0
        %v2347 = vpop.f32.mrb[0].mxu0
        %v2348 = vadd.f32 %v2163, %v2347
        %v2349 = vpop.f32.mrb[0].mxu0
        %2350 = vmatprep.mubr.bf16.mxu0 0
        %2351 = vmatmul.mubr.bf16.gmra.mrb[0].mxu0 %v751
        %v2352 = vpop.f32.mrb[0].mxu0
        %v2353 = vadd.f32 %v2168, %v2352
        %v2354 = vpop.f32.mrb[0].mxu0
        %v2355 = vpop.f32.mrb[0].mxu0
        %v2356 = vadd.f32 %v2171, %v2355
        %v2357 = vpop.f32.mrb[0].mxu0
        %2358 = vmatprep.mubr.bf16.mxu0 0
        %2359 = vmatmul.mubr.bf16.gmra.mrb[0].mxu0 %v754
        %v2360 = vpop.f32.mrb[0].mxu0
        %v2361 = vadd.f32 %v2176, %v2360
        %v2362 = vpop.f32.mrb[0].mxu0
        %v2363 = vpop.f32.mrb[0].mxu0
        %v2364 = vadd.f32 %v2179, %v2363
        %v2365 = vpop.f32.mrb[0].mxu0
        %2366 = vmatprep.mubr.bf16.mxu0 0
        %2367 = vmatmul.mubr.bf16.gmra.mrb[0].mxu0 %v757
        %v2368 = vpop.f32.mrb[0].mxu0
        %v2369 = vadd.f32 %v2184, %v2368
        %v2370 = vpop.f32.mrb[0].mxu0
        %v2371 = vpop.f32.mrb[0].mxu0
        %v2372 = vadd.f32 %v2187, %v2371
        %v2373 = vpop.f32.mrb[0].mxu0
        %2374 = vdwg.mxu0
        %s2375 = scalar_lea.vmem [#allocation2], 256
        %v2376 = vld [vmem:[%s2375] sm:$0xf]
        %v2377 = vld [vmem:[%s2375 + $0x4] sm:$0xf]
        %v2378 = vld [vmem:[%s2375 + $0x8] sm:$0xf]
        %v2379 = vld [vmem:[%s2375 + $0xc] sm:$0xf]
        %v2380 = vld [vmem:[%s2375 + $0x10] sm:$0xf]
        %v2381 = vld [vmem:[%s2375 + $0x14] sm:$0xf]
        %v2382 = vld [vmem:[%s2375 + $0x18] sm:$0xf]
        %v2383 = vld [vmem:[%s2375 + $0x1c] sm:$0xf]
        %v2392 = vunpack.c.l.b16 %v2376
        %v2393 = vunpack.c.l.b16 %v2377
        %v2394 = vunpack.c.l.b16 %v2378
        %v2395 = vunpack.c.l.b16 %v2379
        %v2396 = vunpack.c.l.b16 %v2380
        %v2397 = vunpack.c.l.b16 %v2381
        %v2398 = vunpack.c.l.b16 %v2382
        %v2399 = vunpack.c.l.b16 %v2383
        %v2400 = vpack.c.b16 %v2393, %v2392
        %v2401 = vpack.c.b16 %v2395, %v2394
        %v2402 = vpack.c.b16 %v2397, %v2396
        %v2403 = vpack.c.b16 %v2399, %v2398
        %2408 = vmatprep.subr.bf16.mxu0 0
        %2409 = vmatpush1.bf16.msra.mxu0 %v2400
        %2410 = vmatprep.subr.bf16.mxu0 0
        %2411 = vmatpush1.bf16.msra.mxu0 %v2401
        %2412 = vmatprep.subr.bf16.mxu0 0
        %2413 = vmatpush1.bf16.msra.mxu0 %v2402
        %2414 = vmatprep.subr.bf16.mxu0 0
        %2415 = vmatpush1.bf16.msra.mxu0 %v2403
        %2416 = vmatprep.subr.bf16.mxu0 0
        %2417 = vmatpush1.bf16.msra.mxu0 0
        %2418 = vmatprep.subr.bf16.mxu0 0
        %2419 = vmatpush1.bf16.msra.mxu0 0
        %2420 = vmatprep.subr.bf16.mxu0 0
        %2421 = vmatpush1.bf16.msra.mxu0 0
        %2422 = vmatprep.subr.bf16.mxu0 0
        %2423 = vmatpush1.bf16.msra.mxu0 0
        %2424 = vmatprep.subr.bf16.mxu0 0
        %2425 = vmatpush1.bf16.msra.mxu0 0
        %2426 = vmatprep.subr.bf16.mxu0 0
        %2427 = vmatpush1.bf16.msra.mxu0 0
        %2428 = vmatprep.subr.bf16.mxu0 0
        %2429 = vmatpush1.bf16.msra.mxu0 0
        %2430 = vmatprep.subr.bf16.mxu0 0
        %2431 = vmatpush1.bf16.msra.mxu0 0
        %2432 = vmatprep.subr.bf16.mxu0 0
        %2433 = vmatpush1.bf16.msra.mxu0 0
        %2434 = vmatprep.subr.bf16.mxu0 0
        %2435 = vmatpush1.bf16.msra.mxu0 0
        %2436 = vmatprep.subr.bf16.mxu0 0
        %2437 = vmatpush1.bf16.msra.mxu0 0
        %2438 = vmatprep.subr.bf16.mxu0 0
        %2439 = vmatpush1.bf16.msra.mxu0 0
        %2440 = vmatprep.mubr.bf16.mxu0 0
        %2441 = vmatmul.mubr.bf16.gmra.mrb[0].mxu0 %v1034
        %v2442 = vpop.f32.mrb[0].mxu0
        %v2443 = vadd.f32 0.0, %v2442
        %v2444 = vpop.f32.mrb[0].mxu0
        %v2445 = vpop.f32.mrb[0].mxu0
        %v2446 = vadd.f32 0.0, %v2445
        %v2447 = vpop.f32.mrb[0].mxu0
        %2448 = vmatprep.mubr.bf16.mxu0 0
        %2449 = vmatmul.mubr.bf16.gmra.mrb[0].mxu0 %v1037
        %v2450 = vpop.f32.mrb[0].mxu0
        %v2451 = vadd.f32 0.0, %v2450
        %v2452 = vpop.f32.mrb[0].mxu0
        %v2453 = vpop.f32.mrb[0].mxu0
        %v2454 = vadd.f32 0.0, %v2453
        %v2455 = vpop.f32.mrb[0].mxu0
        %2456 = vmatprep.mubr.bf16.mxu0 0
        %2457 = vmatmul.mubr.bf16.gmra.mrb[0].mxu0 %v1040
        %v2458 = vpop.f32.mrb[0].mxu0
        %v2459 = vadd.f32 0.0, %v2458
        %v2460 = vpop.f32.mrb[0].mxu0
        %v2461 = vpop.f32.mrb[0].mxu0
        %v2462 = vadd.f32 0.0, %v2461
        %v2463 = vpop.f32.mrb[0].mxu0
        %2464 = vmatprep.mubr.bf16.mxu0 0
        %2465 = vmatmul.mubr.bf16.gmra.mrb[0].mxu0 %v1043
        %v2466 = vpop.f32.mrb[0].mxu0
        %v2467 = vadd.f32 0.0, %v2466
        %v2468 = vpop.f32.mrb[0].mxu0
        %v2469 = vpop.f32.mrb[0].mxu0
        %v2470 = vadd.f32 0.0, %v2469
        %v2471 = vpop.f32.mrb[0].mxu0
        %2472 = vmatprep.mubr.bf16.mxu0 0
        %2473 = vmatmul.mubr.bf16.gmra.mrb[0].mxu0 %v1046
        %v2474 = vpop.f32.mrb[0].mxu0
        %v2475 = vadd.f32 0.0, %v2474
        %v2476 = vpop.f32.mrb[0].mxu0
        %v2477 = vpop.f32.mrb[0].mxu0
        %v2478 = vadd.f32 0.0, %v2477
        %v2479 = vpop.f32.mrb[0].mxu0
        %2480 = vmatprep.mubr.bf16.mxu0 0
        %2481 = vmatmul.mubr.bf16.gmra.mrb[0].mxu0 %v1049
        %v2482 = vpop.f32.mrb[0].mxu0
        %v2483 = vadd.f32 0.0, %v2482
        %v2484 = vpop.f32.mrb[0].mxu0
        %v2485 = vpop.f32.mrb[0].mxu0
        %v2486 = vadd.f32 0.0, %v2485
        %v2487 = vpop.f32.mrb[0].mxu0
        %2488 = vmatprep.mubr.bf16.mxu0 0
        %2489 = vmatmul.mubr.bf16.gmra.mrb[0].mxu0 %v1052
        %v2490 = vpop.f32.mrb[0].mxu0
        %v2491 = vadd.f32 0.0, %v2490
        %v2492 = vpop.f32.mrb[0].mxu0
        %v2493 = vpop.f32.mrb[0].mxu0
        %v2494 = vadd.f32 0.0, %v2493
        %v2495 = vpop.f32.mrb[0].mxu0
        %2496 = vmatprep.mubr.bf16.mxu0 0
        %2497 = vmatmul.mubr.bf16.gmra.mrb[0].mxu0 %v1055
        %v2498 = vpop.f32.mrb[0].mxu0
        %v2499 = vadd.f32 0.0, %v2498
        %v2500 = vpop.f32.mrb[0].mxu0
        %v2501 = vpop.f32.mrb[0].mxu0
        %v2502 = vadd.f32 0.0, %v2501
        %v2503 = vpop.f32.mrb[0].mxu0
        %2504 = vmatprep.mubr.bf16.mxu0 0
        %2505 = vmatmul.mubr.bf16.gmra.mrb[0].mxu0 %v1058
        %v2506 = vpop.f32.mrb[0].mxu0
        %v2507 = vadd.f32 0.0, %v2506
        %v2508 = vpop.f32.mrb[0].mxu0
        %v2509 = vpop.f32.mrb[0].mxu0
        %v2510 = vadd.f32 0.0, %v2509
        %v2511 = vpop.f32.mrb[0].mxu0
        %2512 = vmatprep.mubr.bf16.mxu0 0
        %2513 = vmatmul.mubr.bf16.gmra.mrb[0].mxu0 %v1061
        %v2514 = vpop.f32.mrb[0].mxu0
        %v2515 = vadd.f32 0.0, %v2514
        %v2516 = vpop.f32.mrb[0].mxu0
        %v2517 = vpop.f32.mrb[0].mxu0
        %v2518 = vadd.f32 0.0, %v2517
        %v2519 = vpop.f32.mrb[0].mxu0
        %2520 = vmatprep.mubr.bf16.mxu0 0
        %2521 = vmatmul.mubr.bf16.gmra.mrb[0].mxu0 %v1064
        %v2522 = vpop.f32.mrb[0].mxu0
        %v2523 = vadd.f32 0.0, %v2522
        %v2524 = vpop.f32.mrb[0].mxu0
        %v2525 = vpop.f32.mrb[0].mxu0
        %v2526 = vadd.f32 0.0, %v2525
        %v2527 = vpop.f32.mrb[0].mxu0
        %2528 = vmatprep.mubr.bf16.mxu0 0
        %2529 = vmatmul.mubr.bf16.gmra.mrb[0].mxu0 %v1067
        %v2530 = vpop.f32.mrb[0].mxu0
        %v2531 = vadd.f32 0.0, %v2530
        %v2532 = vpop.f32.mrb[0].mxu0
        %v2533 = vpop.f32.mrb[0].mxu0
        %v2534 = vadd.f32 0.0, %v2533
        %v2535 = vpop.f32.mrb[0].mxu0
        %2536 = vmatprep.mubr.bf16.mxu0 0
        %2537 = vmatmul.mubr.bf16.gmra.mrb[0].mxu0 %v1070
        %v2538 = vpop.f32.mrb[0].mxu0
        %v2539 = vadd.f32 0.0, %v2538
        %v2540 = vpop.f32.mrb[0].mxu0
        %v2541 = vpop.f32.mrb[0].mxu0
        %v2542 = vadd.f32 0.0, %v2541
        %v2543 = vpop.f32.mrb[0].mxu0
        %2544 = vmatprep.mubr.bf16.mxu0 0
        %2545 = vmatmul.mubr.bf16.gmra.mrb[0].mxu0 %v1073
        %v2546 = vpop.f32.mrb[0].mxu0
        %v2547 = vadd.f32 0.0, %v2546
        %v2548 = vpop.f32.mrb[0].mxu0
        %v2549 = vpop.f32.mrb[0].mxu0
        %v2550 = vadd.f32 0.0, %v2549
        %v2551 = vpop.f32.mrb[0].mxu0
        %2552 = vmatprep.mubr.bf16.mxu0 0
        %2553 = vmatmul.mubr.bf16.gmra.mrb[0].mxu0 %v1076
        %v2554 = vpop.f32.mrb[0].mxu0
        %v2555 = vadd.f32 0.0, %v2554
        %v2556 = vpop.f32.mrb[0].mxu0
        %v2557 = vpop.f32.mrb[0].mxu0
        %v2558 = vadd.f32 0.0, %v2557
        %v2559 = vpop.f32.mrb[0].mxu0
        %2560 = vmatprep.mubr.bf16.mxu0 0
        %2561 = vmatmul.mubr.bf16.gmra.mrb[0].mxu0 %v1079
        %v2562 = vpop.f32.mrb[0].mxu0
        %v2563 = vadd.f32 0.0, %v2562
        %v2564 = vpop.f32.mrb[0].mxu0
        %v2565 = vpop.f32.mrb[0].mxu0
        %v2566 = vadd.f32 0.0, %v2565
        %v2567 = vpop.f32.mrb[0].mxu0
        %2568 = vdwg.mxu0
        %v2569 = vadd.f32 %v2249, %v2443
        %v2570 = vadd.f32 %v2252, %v2446
        %v2571 = vadd.f32 %v2257, %v2451
        %v2572 = vadd.f32 %v2260, %v2454
        %v2573 = vadd.f32 %v2265, %v2459
        %v2574 = vadd.f32 %v2268, %v2462
        %v2575 = vadd.f32 %v2273, %v2467
        %v2576 = vadd.f32 %v2276, %v2470
        %v2577 = vadd.f32 %v2281, %v2475
        %v2578 = vadd.f32 %v2284, %v2478
        %v2579 = vadd.f32 %v2289, %v2483
        %v2580 = vadd.f32 %v2292, %v2486
        %v2581 = vadd.f32 %v2297, %v2491
        %v2582 = vadd.f32 %v2300, %v2494
        %v2583 = vadd.f32 %v2305, %v2499
        %v2584 = vadd.f32 %v2308, %v2502
        %v2585 = vadd.f32 %v2313, %v2507
        %v2586 = vadd.f32 %v2316, %v2510
        %v2587 = vadd.f32 %v2321, %v2515
        %v2588 = vadd.f32 %v2324, %v2518
        %v2589 = vadd.f32 %v2329, %v2523
        %v2590 = vadd.f32 %v2332, %v2526
        %v2591 = vadd.f32 %v2337, %v2531
        %v2592 = vadd.f32 %v2340, %v2534
        %v2593 = vadd.f32 %v2345, %v2539
        %v2594 = vadd.f32 %v2348, %v2542
        %v2595 = vadd.f32 %v2353, %v2547
        %v2596 = vadd.f32 %v2356, %v2550
        %v2597 = vadd.f32 %v2361, %v2555
        %v2598 = vadd.f32 %v2364, %v2558
        %v2599 = vadd.f32 %v2369, %v2563
        %v2600 = vadd.f32 %v2372, %v2566
        %v2601 = vrot.slane %v2569, 2
        %v2602 = vrot.slane %v2570, 2
        %v2603 = vrot.slane %v2571, 2
        %v2604 = vrot.slane %v2572, 2
        %v2605 = vrot.slane %v2573, 2
        %v2606 = vrot.slane %v2574, 2
        %v2607 = vrot.slane %v2575, 2
        %v2608 = vrot.slane %v2576, 2
        %v2609 = vrot.slane %v2577, 2
        %v2610 = vrot.slane %v2578, 2
        %v2611 = vrot.slane %v2579, 2
        %v2612 = vrot.slane %v2580, 2
        %v2613 = vrot.slane %v2581, 2
        %v2614 = vrot.slane %v2582, 2
        %v2615 = vrot.slane %v2583, 2
        %v2616 = vrot.slane %v2584, 2
        %v2617 = vrot.slane %v2585, 2
        %v2618 = vrot.slane %v2586, 2
        %v2619 = vrot.slane %v2587, 2
        %v2620 = vrot.slane %v2588, 2
        %v2621 = vrot.slane %v2589, 2
        %v2622 = vrot.slane %v2590, 2
        %v2623 = vrot.slane %v2591, 2
        %v2624 = vrot.slane %v2592, 2
        %v2625 = vrot.slane %v2593, 2
        %v2626 = vrot.slane %v2594, 2
        %v2627 = vrot.slane %v2595, 2
        %v2628 = vrot.slane %v2596, 2
        %v2629 = vrot.slane %v2597, 2
        %v2630 = vrot.slane %v2598, 2
        %v2631 = vrot.slane %v2599, 2
        %v2632 = vrot.slane %v2600, 2
        %vm2633 = vcmp.lt.s32.totalorder %v1921, 6
        %v2634 = vsel %vm2633, %v2631, %v2632
        %v2635 = vsel %vm2633, %v2630, %v2631
        %v2636 = vsel %vm2633, %v2629, %v2630
        %v2637 = vsel %vm2633, %v2628, %v2629
        %v2638 = vsel %vm2633, %v2627, %v2628
        %v2639 = vsel %vm2633, %v2626, %v2627
        %v2640 = vsel %vm2633, %v2625, %v2626
        %v2641 = vsel %vm2633, %v2624, %v2625
        %v2642 = vsel %vm2633, %v2623, %v2624
        %v2643 = vsel %vm2633, %v2622, %v2623
        %v2644 = vsel %vm2633, %v2621, %v2622
        %v2645 = vsel %vm2633, %v2620, %v2621
        %v2646 = vsel %vm2633, %v2619, %v2620
        %v2647 = vsel %vm2633, %v2618, %v2619
        %v2648 = vsel %vm2633, %v2617, %v2618
        %v2649 = vsel %vm2633, %v2616, %v2617
        %v2650 = vsel %vm2633, %v2615, %v2616
        %v2651 = vsel %vm2633, %v2614, %v2615
        %v2652 = vsel %vm2633, %v2613, %v2614
        %v2653 = vsel %vm2633, %v2612, %v2613
        %v2654 = vsel %vm2633, %v2611, %v2612
        %v2655 = vsel %vm2633, %v2610, %v2611
        %v2656 = vsel %vm2633, %v2609, %v2610
        %v2657 = vsel %vm2633, %v2608, %v2609
        %v2658 = vsel %vm2633, %v2607, %v2608
        %v2659 = vsel %vm2633, %v2606, %v2607
        %v2660 = vsel %vm2633, %v2605, %v2606
        %v2661 = vsel %vm2633, %v2604, %v2605
        %v2662 = vsel %vm2633, %v2603, %v2604
        %v2663 = vsel %vm2633, %v2602, %v2603
        %v2664 = vsel %vm2633, %v2601, %v2602
        %v2665 = vsel %vm2633, %v2632, %v2601
        %v2666 = vadd.f32 %v1955, %v2664
        %v2667 = vadd.f32 %v1956, %v2663
        %v2668 = vadd.f32 %v1957, %v2662
        %v2669 = vadd.f32 %v1958, %v2661
        %v2670 = vadd.f32 %v1959, %v2660
        %v2671 = vadd.f32 %v1960, %v2659
        %v2672 = vadd.f32 %v1961, %v2658
        %v2673 = vadd.f32 %v1962, %v2657
        %v2674 = vadd.f32 %v1963, %v2656
        %v2675 = vadd.f32 %v1964, %v2655
        %v2676 = vadd.f32 %v1965, %v2654
        %v2677 = vadd.f32 %v1966, %v2653
        %v2678 = vadd.f32 %v1967, %v2652
        %v2679 = vadd.f32 %v1968, %v2651
        %v2680 = vadd.f32 %v1969, %v2650
        %v2681 = vadd.f32 %v1970, %v2649
        %v2682 = vadd.f32 %v1971, %v2648
        %v2683 = vadd.f32 %v1972, %v2647
        %v2684 = vadd.f32 %v1973, %v2646
        %v2685 = vadd.f32 %v1974, %v2645
        %v2686 = vadd.f32 %v1975, %v2644
        %v2687 = vadd.f32 %v1976, %v2643
        %v2688 = vadd.f32 %v1977, %v2642
        %v2689 = vadd.f32 %v1978, %v2641
        %v2690 = vadd.f32 %v1979, %v2640
        %v2691 = vadd.f32 %v1980, %v2639
        %v2692 = vadd.f32 %v1981, %v2638
        %v2693 = vadd.f32 %v1982, %v2637
        %v2694 = vadd.f32 %v1983, %v2636
        %v2695 = vadd.f32 %v1984, %v2635
        %v2696 = vadd.f32 %v1985, %v2634
        %v2697 = vadd.f32 %v1986, %v2665
        %v2698 = vld [vmem:[%s2] sm:$0x1]
        %v2700 = vlaneseq
        %v2701 = vshrl.u32 %v2700, 7
        %v2702 = vsub.s32 0, %v2701
        %v2703 = vrot.slane %v2698, %v2702
        %v2705 = vadd.f32 %v2666, %v2703
        %v2706 = vadd.f32 %v2667, %v2703
        %v2707 = vadd.f32 %v2668, %v2703
        %v2708 = vadd.f32 %v2669, %v2703
        %v2709 = vadd.f32 %v2670, %v2703
        %v2710 = vadd.f32 %v2671, %v2703
        %v2711 = vadd.f32 %v2672, %v2703
        %v2712 = vadd.f32 %v2673, %v2703
        %v2713 = vadd.f32 %v2674, %v2703
        %v2714 = vadd.f32 %v2675, %v2703
        %v2715 = vadd.f32 %v2676, %v2703
        %v2716 = vadd.f32 %v2677, %v2703
        %v2717 = vadd.f32 %v2678, %v2703
        %v2718 = vadd.f32 %v2679, %v2703
        %v2719 = vadd.f32 %v2680, %v2703
        %v2720 = vadd.f32 %v2681, %v2703
        %v2721 = vadd.f32 %v2682, %v2703
        %v2722 = vadd.f32 %v2683, %v2703
        %v2723 = vadd.f32 %v2684, %v2703
        %v2724 = vadd.f32 %v2685, %v2703
        %v2725 = vadd.f32 %v2686, %v2703
        %v2726 = vadd.f32 %v2687, %v2703
        %v2727 = vadd.f32 %v2688, %v2703
        %v2728 = vadd.f32 %v2689, %v2703
        %v2729 = vadd.f32 %v2690, %v2703
        %v2730 = vadd.f32 %v2691, %v2703
        %v2731 = vadd.f32 %v2692, %v2703
        %v2732 = vadd.f32 %v2693, %v2703
        %v2733 = vadd.f32 %v2694, %v2703
        %v2734 = vadd.f32 %v2695, %v2703
        %v2735 = vadd.f32 %v2696, %v2703
        %v2736 = vadd.f32 %v2697, %v2703
        %v2737 = vlaneseq
        %v2738 = vand.u32 %v2737, 127
        %v2739 = vsub.f32 0.0, %v2705
        %v2740 = vsub.f32 0.0, %v2706
        %v2741 = vsub.f32 0.0, %v2707
        %v2742 = vsub.f32 0.0, %v2708
        %v2743 = vsub.f32 0.0, %v2709
        %v2744 = vsub.f32 0.0, %v2710
        %v2745 = vsub.f32 0.0, %v2711
        %v2746 = vsub.f32 0.0, %v2712
        %v2747 = vsub.f32 0.0, %v2713
        %v2748 = vsub.f32 0.0, %v2714
        %v2749 = vsub.f32 0.0, %v2715
        %v2750 = vsub.f32 0.0, %v2716
        %v2751 = vsub.f32 0.0, %v2717
        %v2752 = vsub.f32 0.0, %v2718
        %v2753 = vsub.f32 0.0, %v2719
        %v2754 = vsub.f32 0.0, %v2720
        %v2755 = vsub.f32 0.0, %v2721
        %v2756 = vsub.f32 0.0, %v2722
        %v2757 = vsub.f32 0.0, %v2723
        %v2758 = vsub.f32 0.0, %v2724
        %v2759 = vsub.f32 0.0, %v2725
        %v2760 = vsub.f32 0.0, %v2726
        %v2761 = vsub.f32 0.0, %v2727
        %v2762 = vsub.f32 0.0, %v2728
        %v2763 = vsub.f32 0.0, %v2729
        %v2764 = vsub.f32 0.0, %v2730
        %v2765 = vsub.f32 0.0, %v2731
        %v2766 = vsub.f32 0.0, %v2732
        %v2767 = vsub.f32 0.0, %v2733
        %v2768 = vsub.f32 0.0, %v2734
        %v2769 = vsub.f32 0.0, %v2735
        %v2770 = vsub.f32 0.0, %v2736
        %v2771 = vmul.f32 %v2739, 1.442695
        %v2772 = vpow.pop %v2771
        %v2773 = vmul.f32 %v2740, 1.442695
        %v2774 = vpow.pop %v2773
        %v2775 = vmul.f32 %v2741, 1.442695
        %v2776 = vpow.pop %v2775
        %v2777 = vmul.f32 %v2742, 1.442695
        %v2778 = vpow.pop %v2777
        %v2779 = vmul.f32 %v2743, 1.442695
        %v2780 = vpow.pop %v2779
        %v2781 = vmul.f32 %v2744, 1.442695
        %v2782 = vpow.pop %v2781
        %v2783 = vmul.f32 %v2745, 1.442695
        %v2784 = vpow.pop %v2783
        %v2785 = vmul.f32 %v2746, 1.442695
        %v2786 = vpow.pop %v2785
        %v2787 = vmul.f32 %v2747, 1.442695
        %v2788 = vpow.pop %v2787
        %v2789 = vmul.f32 %v2748, 1.442695
        %v2790 = vpow.pop %v2789
        %v2791 = vmul.f32 %v2749, 1.442695
        %v2792 = vpow.pop %v2791
        %v2793 = vmul.f32 %v2750, 1.442695
        %v2794 = vpow.pop %v2793
        %v2795 = vmul.f32 %v2751, 1.442695
        %v2796 = vpow.pop %v2795
        %v2797 = vmul.f32 %v2752, 1.442695
        %v2798 = vpow.pop %v2797
        %v2799 = vmul.f32 %v2753, 1.442695
        %v2800 = vpow.pop %v2799
        %v2801 = vmul.f32 %v2754, 1.442695
        %v2802 = vpow.pop %v2801
        %v2803 = vmul.f32 %v2755, 1.442695
        %v2804 = vpow.pop %v2803
        %v2805 = vmul.f32 %v2756, 1.442695
        %v2806 = vpow.pop %v2805
        %v2807 = vmul.f32 %v2757, 1.442695
        %v2808 = vpow.pop %v2807
        %v2809 = vmul.f32 %v2758, 1.442695
        %v2810 = vpow.pop %v2809
        %v2811 = vmul.f32 %v2759, 1.442695
        %v2812 = vpow.pop %v2811
        %v2813 = vmul.f32 %v2760, 1.442695
        %v2814 = vpow.pop %v2813
        %v2815 = vmul.f32 %v2761, 1.442695
        %v2816 = vpow.pop %v2815
        %v2817 = vmul.f32 %v2762, 1.442695
        %v2818 = vpow.pop %v2817
        %v2819 = vmul.f32 %v2763, 1.442695
        %v2820 = vpow.pop %v2819
        %v2821 = vmul.f32 %v2764, 1.442695
        %v2822 = vpow.pop %v2821
        %v2823 = vmul.f32 %v2765, 1.442695
        %v2824 = vpow.pop %v2823
        %v2825 = vmul.f32 %v2766, 1.442695
        %v2826 = vpow.pop %v2825
        %v2827 = vmul.f32 %v2767, 1.442695
        %v2828 = vpow.pop %v2827
        %v2829 = vmul.f32 %v2768, 1.442695
        %v2830 = vpow.pop %v2829
        %v2831 = vmul.f32 %v2769, 1.442695
        %v2832 = vpow.pop %v2831
        %v2833 = vmul.f32 %v2770, 1.442695
        %v2834 = vpow.pop %v2833
        %v2835 = vadd.f32 %v2772, 1.0
        %v2836 = vadd.f32 %v2774, 1.0
        %v2837 = vadd.f32 %v2776, 1.0
        %v2838 = vadd.f32 %v2778, 1.0
        %v2839 = vadd.f32 %v2780, 1.0
        %v2840 = vadd.f32 %v2782, 1.0
        %v2841 = vadd.f32 %v2784, 1.0
        %v2842 = vadd.f32 %v2786, 1.0
        %v2843 = vadd.f32 %v2788, 1.0
        %v2844 = vadd.f32 %v2790, 1.0
        %v2845 = vadd.f32 %v2792, 1.0
        %v2846 = vadd.f32 %v2794, 1.0
        %v2847 = vadd.f32 %v2796, 1.0
        %v2848 = vadd.f32 %v2798, 1.0
        %v2849 = vadd.f32 %v2800, 1.0
        %v2850 = vadd.f32 %v2802, 1.0
        %v2851 = vadd.f32 %v2804, 1.0
        %v2852 = vadd.f32 %v2806, 1.0
        %v2853 = vadd.f32 %v2808, 1.0
        %v2854 = vadd.f32 %v2810, 1.0
        %v2855 = vadd.f32 %v2812, 1.0
        %v2856 = vadd.f32 %v2814, 1.0
        %v2857 = vadd.f32 %v2816, 1.0
        %v2858 = vadd.f32 %v2818, 1.0
        %v2859 = vadd.f32 %v2820, 1.0
        %v2860 = vadd.f32 %v2822, 1.0
        %v2861 = vadd.f32 %v2824, 1.0
        %v2862 = vadd.f32 %v2826, 1.0
        %v2863 = vadd.f32 %v2828, 1.0
        %v2864 = vadd.f32 %v2830, 1.0
        %v2865 = vadd.f32 %v2832, 1.0
        %v2866 = vadd.f32 %v2834, 1.0
        %v2867 = vrcp.pop %v2835
        %v2868 = vrcp.pop %v2836
        %v2869 = vrcp.pop %v2837
        %v2870 = vrcp.pop %v2838
        %v2871 = vrcp.pop %v2839
        %v2872 = vrcp.pop %v2840
        %v2873 = vrcp.pop %v2841
        %v2874 = vrcp.pop %v2842
        %v2875 = vrcp.pop %v2843
        %v2876 = vrcp.pop %v2844
        %v2877 = vrcp.pop %v2845
        %v2878 = vrcp.pop %v2846
        %v2879 = vrcp.pop %v2847
        %v2880 = vrcp.pop %v2848
        %v2881 = vrcp.pop %v2849
        %v2882 = vrcp.pop %v2850
        %v2883 = vrcp.pop %v2851
        %v2884 = vrcp.pop %v2852
        %v2885 = vrcp.pop %v2853
        %v2886 = vrcp.pop %v2854
        %v2887 = vrcp.pop %v2855
        %v2888 = vrcp.pop %v2856
        %v2889 = vrcp.pop %v2857
        %v2890 = vrcp.pop %v2858
        %v2891 = vrcp.pop %v2859
        %v2892 = vrcp.pop %v2860
        %v2893 = vrcp.pop %v2861
        %v2894 = vrcp.pop %v2862
        %v2895 = vrcp.pop %v2863
        %v2896 = vrcp.pop %v2864
        %v2897 = vrcp.pop %v2865
        %v2898 = vrcp.pop %v2866
        %vm2899 = vcmp.ge.s32.totalorder %v2738, 54
        %vm2900 = vcmp.lt.s32.totalorder %v2738, 63
        %vm2901 = vmand %vm2899, %vm2900
        %v2902 = vsel %vm2901, %v2867, %v2705
        %v2903 = vsel %vm2901, %v2868, %v2706
        %v2904 = vsel %vm2901, %v2869, %v2707
        %v2905 = vsel %vm2901, %v2870, %v2708
        %v2906 = vsel %vm2901, %v2871, %v2709
        %v2907 = vsel %vm2901, %v2872, %v2710
        %v2908 = vsel %vm2901, %v2873, %v2711
        %v2909 = vsel %vm2901, %v2874, %v2712
        %v2910 = vsel %vm2901, %v2875, %v2713
        %v2911 = vsel %vm2901, %v2876, %v2714
        %v2912 = vsel %vm2901, %v2877, %v2715
        %v2913 = vsel %vm2901, %v2878, %v2716
        %v2914 = vsel %vm2901, %v2879, %v2717
        %v2915 = vsel %vm2901, %v2880, %v2718
        %v2916 = vsel %vm2901, %v2881, %v2719
        %v2917 = vsel %vm2901, %v2882, %v2720
        %v2918 = vsel %vm2901, %v2883, %v2721
        %v2919 = vsel %vm2901, %v2884, %v2722
        %v2920 = vsel %vm2901, %v2885, %v2723
        %v2921 = vsel %vm2901, %v2886, %v2724
        %v2922 = vsel %vm2901, %v2887, %v2725
        %v2923 = vsel %vm2901, %v2888, %v2726
        %v2924 = vsel %vm2901, %v2889, %v2727
        %v2925 = vsel %vm2901, %v2890, %v2728
        %v2926 = vsel %vm2901, %v2891, %v2729
        %v2927 = vsel %vm2901, %v2892, %v2730
        %v2928 = vsel %vm2901, %v2893, %v2731
        %v2929 = vsel %vm2901, %v2894, %v2732
        %v2930 = vsel %vm2901, %v2895, %v2733
        %v2931 = vsel %vm2901, %v2896, %v2734
        %v2932 = vsel %vm2901, %v2897, %v2735
        %v2933 = vsel %vm2901, %v2898, %v2736
        %2934 = vst [vmem:[%s165] sm:$0xff] %v2902
        %2935 = vst [vmem:[%s165 + $0x8] sm:$0xff] %v2903
        %2936 = vst [vmem:[%s165 + $0x10] sm:$0xff] %v2904
        %2937 = vst [vmem:[%s165 + $0x18] sm:$0xff] %v2905
        %2938 = vst [vmem:[%s165 + $0x20] sm:$0xff] %v2906
        %2939 = vst [vmem:[%s165 + $0x28] sm:$0xff] %v2907
        %2940 = vst [vmem:[%s165 + $0x30] sm:$0xff] %v2908
        %2941 = vst [vmem:[%s165 + $0x38] sm:$0xff] %v2909
        %2942 = vst [vmem:[%s165 + $0x40] sm:$0xff] %v2910
        %2943 = vst [vmem:[%s165 + $0x48] sm:$0xff] %v2911
        %2944 = vst [vmem:[%s165 + $0x50] sm:$0xff] %v2912
        %2945 = vst [vmem:[%s165 + $0x58] sm:$0xff] %v2913
        %2946 = vst [vmem:[%s165 + $0x60] sm:$0xff] %v2914
        %2947 = vst [vmem:[%s165 + $0x68] sm:$0xff] %v2915
        %2948 = vst [vmem:[%s165 + $0x70] sm:$0xff] %v2916
        %2949 = vst [vmem:[%s165 + $0x78] sm:$0xff] %v2917
        %2950 = vst [vmem:[%s165 + $0x80] sm:$0xff] %v2918
        %2951 = vst [vmem:[%s165 + $0x88] sm:$0xff] %v2919
        %2952 = vst [vmem:[%s165 + $0x90] sm:$0xff] %v2920
        %2953 = vst [vmem:[%s165 + $0x98] sm:$0xff] %v2921
        %2954 = vst [vmem:[%s165 + $0xa0] sm:$0xff] %v2922
        %2955 = vst [vmem:[%s165 + $0xa8] sm:$0xff] %v2923
        %2956 = vst [vmem:[%s165 + $0xb0] sm:$0xff] %v2924
        %2957 = vst [vmem:[%s165 + $0xb8] sm:$0xff] %v2925
        %2958 = vst [vmem:[%s165 + $0xc0] sm:$0xff] %v2926
        %2959 = vst [vmem:[%s165 + $0xc8] sm:$0xff] %v2927
        %2960 = vst [vmem:[%s165 + $0xd0] sm:$0xff] %v2928
        %2961 = vst [vmem:[%s165 + $0xd8] sm:$0xff] %v2929
        %2962 = vst [vmem:[%s165 + $0xe0] sm:$0xff] %v2930
        %2963 = vst [vmem:[%s165 + $0xe8] sm:$0xff] %v2931
        %2964 = vst [vmem:[%s165 + $0xf0] sm:$0xff] %v2932
        %2965 = vst [vmem:[%s165 + $0xf8] sm:$0xff] %v2933
        %s2966 = smul.u32 32, %s15
        %p2967 = scmp.lt.s32.totalorder %s2966, 63
        %s2968 = scalar_select %p2967, %s2966, 63
        %s2969 = smul.addr %s2968, 8
        %s2970 = scalar_lea.vmem %s3, %s2969
        // Predicated region
        $region37: #{_lambda_.1} parent=31 // pred_check
          %p2971 = pneg %p96
        $region38: #{_lambda_.1} parent=31 // pred_check_branch
          %2973 = sbr.rel (%p2971) target = $region40
        $region39: #{_lambda_.1} parent=31 // pred_region
          %s2974 = smul.u32 32, %s15
        $region40: #{_lambda_.1} parent=31 // pred_fallthru
          _
      $region32: #{_lambda_.1} parent=5 // pred_fallthru
        _
      %p2975 = scmp.le.s32.totalorder 2, %s10
      // Predicated region
      $region41: #{_lambda_.1} parent=5 // pred_check
        %p2976 = pneg %p2975
      $region42: #{_lambda_.1} parent=5 // pred_check_branch
        %2978 = sbr.rel (%p2976) target = $region44
      $region43: #{_lambda_.1} parent=5 // pred_region
        %s2979 = ssub.s32 %s10, 2
        // Predicated region
        $region45: #{_lambda_.1} parent=43 // pred_check
          %p2980 = pneg %p102
        $region46: #{_lambda_.1} parent=43 // pred_check_branch
          %2982 = sbr.rel (%p2980) target = $region48
        $region47: #{_lambda_.1} parent=43 // pred_region
          %s2983 = smul.u32 32, %s16
          %p2984 = scmp.lt.s32.totalorder %s2983, 63
          %s2985 = scalar_select %p2984, %s2983, 63
          %s2986 = smul.addr %s2985, 8
          %s2987 = scalar_lea.vmem %s3, %s2986
        $region48: #{_lambda_.1} parent=43 // pred_fallthru
          _
      $region44: #{_lambda_.1} parent=5 // pred_fallthru
        _
    $region6: #{_lambda_.1} parent=1 // loop_footer
      %s14 = sadd.s32 1, %s10
    $region7: #{_lambda_.1} parent=1 // loop_footer_branch
      %9 = sbr.rel target = $region3
    $region8: #{_lambda_.1} parent=1 // loop_exit
      _
    %2988 = vsyncpa [#allocation3], 1
    %s2989 = scalar_lea.sflag [#allocation3], 1
    %2990 = vsyncpa %s2989, 1

</llo_original>
